<compile_context>
chip_gen: v5e
topology: v5e:2x2
jax: 0.10.0
libtpu: 0.0.40
codegen_flags: <defaults>
</compile_context>

<pallas_src>
import functools
import math

import jax
import jax.numpy as jnp
from jax.experimental import pallas as pl
from jax.experimental.pallas import tpu as pltpu

# ----------------------- small-BERT config -----------------------
VOCAB = 128
MAX_POS = 64
HIDDEN = 32
HEADS = 4
HEAD_DIM = HIDDEN // HEADS
INTERMEDIATE = 64
LAYERS = 2
NUM_CLASSES = 3
LN_EPS = 1e-12
NPAD = 128            # lane-dense padded width for the classifier head output
VECW = 3 * HIDDEN     # packed per-layer vector width (fits bqkv = 3H)

# tanh-approx GELU keeps the FFN activation off the VALU slot (v5e); set False for BERT's
# exact erf GELU if bit-parity with the reference matters (numerics differ slightly).
GELU_APPROX = True


# ----------------------- fused Pallas kernel -----------------------
def _bert_fused_kernel(emb_ref, mask_ref, wqkv_ref, wo_ref, wi_ref, wo2_ref,
                       vecs_ref, gvecs_ref, pw_ref, fw_ref, o_ref, *, S):
    H, NH, DH, I = HIDDEN, HEADS, HEAD_DIM, INTERMEDIATE

    def layernorm(v, g, b):
        mu = jnp.mean(v, axis=-1, keepdims=True)
        vc = v - mu
        var = jnp.mean(vc * vc, axis=-1, keepdims=True)
        return vc * jax.lax.rsqrt(var + LN_EPS) * g + b

    def gelu(v):
        if GELU_APPROX:
            c = jnp.float32(0.7978845608028654)   # sqrt(2/pi)
            return 0.5 * v * (1.0 + jnp.tanh(c * (v + 0.044715 * v * v * v)))
        return 0.5 * v * (1.0 + jax.lax.erf(v * jnp.float32(0.7071067811865476)))

    def mm(a, w):
        # bf16 MXU inputs, f32 accumulation; weights are already bf16.
        return jnp.dot(a.astype(jnp.bfloat16), w, preferred_element_type=jnp.float32)

    # --- unpack packed global vectors ---
    g = gvecs_ref[...]                                     # (8, 128) f32
    emb_g, emb_b = g[0:1, :H], g[1:2, :H]
    pool_b, fc_b = g[2:3, :H], g[3:4, :]

    # --- embedding layernorm; additive mask hoisted & broadcast once ---
    x = layernorm(emb_ref[0], emb_g, emb_b)                # (S, H) f32
    mask_bc = jnp.broadcast_to(mask_ref[0], (S, S))        # (S, S) additive mask

    # --- encoder layers, fully resident in VMEM ---
    for l in range(LAYERS):
        vl = vecs_ref[l]                                   # (8, VECW) packed vectors
        bqkv, bo = vl[0:1, :3 * H], vl[1:2, :H]
        ln1g, ln1b = vl[2:3, :H], vl[3:4, :H]
        bi, bo2 = vl[4:5, :I], vl[5:6, :H]
        ln2g, ln2b = vl[6:7, :H], vl[7:8, :H]

        # fused QKV projection (Q columns/bias pre-scaled by 1/sqrt(DH) in the wrapper)
        qkv = mm(x, wqkv_ref[l]) + bqkv                    # (S, 3H) f32

        # per-head attention; contexts stay as values (no scratch, no masked stores)
        ctx_heads = []
        for h in range(NH):
            q = qkv[:, h * DH:(h + 1) * DH].astype(jnp.bfloat16)
            k = qkv[:, H + h * DH:H + (h + 1) * DH].astype(jnp.bfloat16)
            v = qkv[:, 2 * H + h * DH:2 * H + (h + 1) * DH].astype(jnp.bfloat16)
            # q @ k^T without an explicit transpose
            s = jax.lax.dot_general(q, k, (((1,), (1,)), ((), ())),
                                    preferred_element_type=jnp.float32)
            s = s + mask_bc
            s = s - jnp.max(s, axis=-1, keepdims=True)
            p = jnp.exp(s)
            p = p * pl.reciprocal(jnp.sum(p, axis=-1, keepdims=True), approx=True)
            ctx_heads.append(jnp.dot(p.astype(jnp.bfloat16), v,
                                     preferred_element_type=jnp.float32))
        ctx = jnp.concatenate(ctx_heads, axis=-1)          # (S, H)

        x = layernorm(mm(ctx, wo_ref[l]) + bo + x, ln1g, ln1b)
        ff = gelu(mm(x, wi_ref[l]) + bi)
        x = layernorm(mm(ff, wo2_ref[l]) + bo2 + x, ln2g, ln2b)

    # --- pooler (tanh) + dropout(0.1)[eval identity] + classifier head ---
    # Computed on all S rows (sublane-full matmuls); one lane-dense (S, NPAD) store.
    pooled = jnp.tanh(mm(x, pw_ref[...]) + pool_b)         # (S, H)
    o_ref[0, :, :] = mm(pooled, fw_ref[...]) + fc_b        # (S, NPAD) f32


# ----------------------- parameters (deterministic synthetic init) -----------------------
def init_params(key):
    keys = iter(jax.random.split(key, 128))

    def w(shape, scale=0.02):
        return scale * jax.random.normal(next(keys), shape, dtype=jnp.float32)

    def zeros(shape):
        return jnp.zeros(shape, jnp.float32)

    def ones(shape):
        return jnp.ones(shape, jnp.float32)

    params = {
        "word_emb": w((VOCAB, HIDDEN)),
        "pos_emb": w((MAX_POS, HIDDEN)),
        "type_emb": w((2, HIDDEN)),
        "emb_ln_g": ones((HIDDEN,)),
        "emb_ln_b": zeros((HIDDEN,)),
        "layers": [],
        "pool_w": w((HIDDEN, HIDDEN)),
        "pool_b": zeros((HIDDEN,)),
        "fc_w": w((HIDDEN, NUM_CLASSES)),
        "fc_b": zeros((NUM_CLASSES,)),
    }
    for _ in range(LAYERS):
        params["layers"].append({
            "wq": w((HIDDEN, HIDDEN)), "bq": zeros((HIDDEN,)),
            "wk": w((HIDDEN, HIDDEN)), "bk": zeros((HIDDEN,)),
            "wv": w((HIDDEN, HIDDEN)), "bv": zeros((HIDDEN,)),
            "wo": w((HIDDEN, HIDDEN)), "bo": zeros((HIDDEN,)),
            "ln1_g": ones((HIDDEN,)), "ln1_b": zeros((HIDDEN,)),
            "wi": w((HIDDEN, INTERMEDIATE)), "bi": zeros((INTERMEDIATE,)),
            "wo2": w((INTERMEDIATE, HIDDEN)), "bo2": zeros((HIDDEN,)),
            "ln2_g": ones((HIDDEN,)), "ln2_b": zeros((HIDDEN,)),
        })
    return params


# ----------------------- forward pass -----------------------
def bert_classifier_forward(params, input_ids, attention_mask):
    B, S = input_ids.shape
    H, I = HIDDEN, INTERMEDIATE

    # --- embeddings: gather + adds kept in XLA glue (TODO(synk): no clean Pallas gather
    #     at these sizes); layernorm happens inside the fused kernel ---
    emb = jnp.take(params["word_emb"], input_ids, axis=0)             # (B, S, H)
    emb = emb + params["pos_emb"][:S][None, :, :]
    emb = emb + params["type_emb"][0][None, None, :]                  # token_type_ids == 0
    emb = emb.astype(jnp.float32)

    # additive attention mask: (B, 1, S)
    add_mask = ((1.0 - attention_mask.astype(jnp.float32)) * -10000.0)[:, None, :]

    # --- pack per-layer weights (fused QKV; attention scale folded into Q) ---
    ls = params["layers"]
    scale = 1.0 / math.sqrt(HEAD_DIM)
    wqkv = jnp.stack([jnp.concatenate([l["wq"] * scale, l["wk"], l["wv"]], axis=1)
                      for l in ls]).astype(jnp.bfloat16)              # (L, H, 3H)
    wo = jnp.stack([l["wo"] for l in ls]).astype(jnp.bfloat16)        # (L, H, H)
    wi = jnp.stack([l["wi"] for l in ls]).astype(jnp.bfloat16)        # (L, H, I)
    wo2 = jnp.stack([l["wo2"] for l in ls]).astype(jnp.bfloat16)      # (L, I, H)

    def row(vec, width=VECW):
        return jnp.zeros((width,), jnp.float32).at[:vec.shape[0]].set(vec)

    # packed per-layer vectors: one (L, 8, VECW) tensor (one DMA instead of 12)
    vecs = jnp.stack([
        jnp.stack([
            row(jnp.concatenate([l["bq"] * scale, l["bk"], l["bv"]])),
            row(l["bo"]), row(l["ln1_g"]), row(l["ln1_b"]),
            row(l["bi"]), row(l["bo2"]), row(l["ln2_g"]), row(l["ln2_b"]),
        ]) for l in ls
    ])

    # packed global vectors: emb LN gamma/beta, pooler bias, padded fc bias
    gvecs = jnp.zeros((8, NPAD), jnp.float32)
    gvecs = gvecs.at[0, :H].set(params["emb_ln_g"])
    gvecs = gvecs.at[1, :H].set(params["emb_ln_b"])
    gvecs = gvecs.at[2, :H].set(params["pool_b"])
    gvecs = gvecs.at[3, :NUM_CLASSES].set(params["fc_b"])

    pool_w = params["pool_w"].astype(jnp.bfloat16)
    # lane-dense classifier head: pad output width to 128, slice real logits afterwards
    fc_w_pad = (jnp.zeros((H, NPAD), jnp.float32)
                .at[:, :NUM_CLASSES].set(params["fc_w"])).astype(jnp.bfloat16)

    inputs = (emb, add_mask, wqkv, wo, wi, wo2, vecs, gvecs, pool_w, fc_w_pad)

    def full_spec(t):
        return pl.BlockSpec(t.shape, lambda b, nd=t.ndim: (0,) * nd)

    in_specs = [
        pl.BlockSpec((1, S, H), lambda b: (b, 0, 0)),     # emb: per-batch block
        pl.BlockSpec((1, 1, S), lambda b: (b, 0, 0)),     # additive mask: per-batch block
    ] + [full_spec(t) for t in inputs[2:]]                # weights: resident, fetched once

    kernel = functools.partial(_bert_fused_kernel, S=S)

    # NOTE: if scaled toward real BERT dims, stream per-layer weights via a grid axis and
    # set vmem_limit_bytes explicitly; at these sizes everything fits comfortably.
    out = pl.pallas_call(
        kernel,
        out_shape=jax.ShapeDtypeStruct((B, S, NPAD), jnp.float32),
        grid=(B,),
        in_specs=in_specs,
        out_specs=pl.BlockSpec((1, S, NPAD), lambda b: (b, 0, 0)),
        compiler_params=pltpu.CompilerParams(dimension_semantics=("parallel",)),
    )(*inputs)

    # CLS row per batch element, real logit columns
    return out[:, 0, :NUM_CLASSES]


if __name__ == "__main__":
    key = jax.random.PRNGKey(0)
    k_param, k_ids = jax.random.split(key)

    params = init_params(k_param)

    B, S = 2, 8
    input_ids = jax.random.randint(k_ids, (B, S), 0, VOCAB, dtype=jnp.int32)
    attention_mask = jnp.ones((B, S), jnp.int32).at[1, 6:].set(0)   # second example padded

    fwd = jax.jit(bert_classifier_forward)
    logits = fwd(params, input_ids, attention_mask)
    jax.block_until_ready(logits)

    assert logits.shape == (B, NUM_CLASSES)
    assert bool(jnp.all(jnp.isfinite(logits)))
    print("KERNEL_OK")
</pallas_src>

<mosaic_0001>
module attributes {stable_mosaic.version = 11 : i64} {
  func.func @_bert_fused_kernel(%arg0: i32, %arg1: memref<1x8x32xf32, #tpu.memory_space<vmem>>, %arg2: memref<1x1x8xf32, #tpu.memory_space<vmem>>, %arg3: memref<2x32x96xbf16, #tpu.memory_space<vmem>>, %arg4: memref<2x32x32xbf16, #tpu.memory_space<vmem>>, %arg5: memref<2x32x64xbf16, #tpu.memory_space<vmem>>, %arg6: memref<2x64x32xbf16, #tpu.memory_space<vmem>>, %arg7: memref<2x8x96xf32, #tpu.memory_space<vmem>>, %arg8: memref<8x128xf32, #tpu.memory_space<vmem>>, %arg9: memref<32x32xbf16, #tpu.memory_space<vmem>>, %arg10: memref<32x128xbf16, #tpu.memory_space<vmem>>, %arg11: memref<1x8x128xf32, #tpu.memory_space<vmem>>) attributes {dimension_semantics = [#tpu.dimension_semantics<parallel>], iteration_bounds = array<i64: 2>, scalar_prefetch = 0 : i64, scratch_operands = 0 : i64, tpu.core_type = #tpu.core_type<tc>, window_params = [{transform_indices = @transform_0, window_bounds = array<i64: 1, 8, 32>}, {transform_indices = @transform_1, window_bounds = array<i64: 1, 1, 8>}, {pipeline_mode = #tpu.pipeline_mode<synchronous>, transform_indices = @transform_2, window_bounds = array<i64: 2, 32, 96>}, {pipeline_mode = #tpu.pipeline_mode<synchronous>, transform_indices = @transform_3, window_bounds = array<i64: 2, 32, 32>}, {pipeline_mode = #tpu.pipeline_mode<synchronous>, transform_indices = @transform_4, window_bounds = array<i64: 2, 32, 64>}, {pipeline_mode = #tpu.pipeline_mode<synchronous>, transform_indices = @transform_5, window_bounds = array<i64: 2, 64, 32>}, {pipeline_mode = #tpu.pipeline_mode<synchronous>, transform_indices = @transform_6, window_bounds = array<i64: 2, 8, 96>}, {pipeline_mode = #tpu.pipeline_mode<synchronous>, transform_indices = @transform_7, window_bounds = array<i64: 8, 128>}, {pipeline_mode = #tpu.pipeline_mode<synchronous>, transform_indices = @transform_8, window_bounds = array<i64: 32, 32>}, {pipeline_mode = #tpu.pipeline_mode<synchronous>, transform_indices = @transform_9, window_bounds = array<i64: 32, 128>}, {transform_indices = @transform_10, window_bounds = array<i64: 1, 8, 128>}]} {
    %c0 = arith.constant 0 : index
    %c0_0 = arith.constant 0 : index
    %0 = vector.load %arg8[%c0, %c0_0] : memref<8x128xf32, #tpu.memory_space<vmem>>, vector<8x128xf32>
    %1 = vector.extract_strided_slice %0 {offsets = [0, 0], sizes = [1, 32], strides = [1, 1]} : vector<8x128xf32> to vector<1x32xf32>
    %2 = vector.extract_strided_slice %0 {offsets = [1, 0], sizes = [1, 32], strides = [1, 1]} : vector<8x128xf32> to vector<1x32xf32>
    %3 = vector.extract_strided_slice %0 {offsets = [2, 0], sizes = [1, 32], strides = [1, 1]} : vector<8x128xf32> to vector<1x32xf32>
    %4 = vector.extract_strided_slice %0 {offsets = [3, 0], sizes = [1, 128], strides = [1, 1]} : vector<8x128xf32> to vector<1x128xf32>
    %c0_1 = arith.constant 0 : index
    %c0_2 = arith.constant 0 : index
    %c0_3 = arith.constant 0 : index
    %5 = vector.load %arg1[%c0_1, %c0_2, %c0_3] : memref<1x8x32xf32, #tpu.memory_space<vmem>>, vector<1x8x32xf32>
    %6 = vector.shape_cast %5 : vector<1x8x32xf32> to vector<8x32xf32>
    %cst = arith.constant dense<0.000000e+00> : vector<8xf32>
    %7 = vector.multi_reduction <add>, %6, %cst [1] : vector<8x32xf32> to vector<8xf32>
    %8 = vector.shape_cast %7 : vector<8xf32> to vector<8x1xf32>
    %cst_4 = arith.constant 3.200000e+01 : f32
    %9 = vector.broadcast %cst_4 : f32 to vector<8x1xf32>
    %10 = arith.divf %8, %9 : vector<8x1xf32>
    %11 = vector.broadcast %10 : vector<8x1xf32> to vector<8x32xf32>
    %12 = arith.subf %6, %11 : vector<8x32xf32>
    %13 = arith.mulf %12, %12 : vector<8x32xf32>
    %cst_5 = arith.constant dense<0.000000e+00> : vector<8xf32>
    %14 = vector.multi_reduction <add>, %13, %cst_5 [1] : vector<8x32xf32> to vector<8xf32>
    %15 = vector.shape_cast %14 : vector<8xf32> to vector<8x1xf32>
    %cst_6 = arith.constant 3.200000e+01 : f32
    %16 = vector.broadcast %cst_6 : f32 to vector<8x1xf32>
    %17 = arith.divf %15, %16 : vector<8x1xf32>
    %cst_7 = arith.constant 9.99999996E-13 : f32
    %18 = vector.broadcast %cst_7 : f32 to vector<8x1xf32>
    %19 = arith.addf %17, %18 : vector<8x1xf32>
    %20 = math.rsqrt %19 : vector<8x1xf32>
    %21 = vector.broadcast %20 : vector<8x1xf32> to vector<8x32xf32>
    %22 = arith.mulf %12, %21 : vector<8x32xf32>
    %23 = vector.broadcast %1 : vector<1x32xf32> to vector<8x32xf32>
    %24 = arith.mulf %22, %23 : vector<8x32xf32>
    %25 = vector.broadcast %2 : vector<1x32xf32> to vector<8x32xf32>
    %26 = arith.addf %24, %25 : vector<8x32xf32>
    %c0_8 = arith.constant 0 : index
    %c0_9 = arith.constant 0 : index
    %c0_10 = arith.constant 0 : index
    %27 = vector.load %arg2[%c0_8, %c0_9, %c0_10] : memref<1x1x8xf32, #tpu.memory_space<vmem>>, vector<1x1x8xf32>
    %28 = vector.shape_cast %27 : vector<1x1x8xf32> to vector<1x8xf32>
    %29 = vector.shape_cast %28 : vector<1x8xf32> to vector<1x8xf32>
    %30 = vector.broadcast %29 : vector<1x8xf32> to vector<8x8xf32>
    %c0_11 = arith.constant 0 : index
    %c0_12 = arith.constant 0 : index
    %c0_13 = arith.constant 0 : index
    %31 = vector.load %arg7[%c0_11, %c0_12, %c0_13] : memref<2x8x96xf32, #tpu.memory_space<vmem>>, vector<1x8x96xf32>
    %32 = vector.shape_cast %31 : vector<1x8x96xf32> to vector<8x96xf32>
    %33 = vector.extract_strided_slice %32 {offsets = [0, 0], sizes = [1, 96], strides = [1, 1]} : vector<8x96xf32> to vector<1x96xf32>
    %34 = vector.extract_strided_slice %32 {offsets = [1, 0], sizes = [1, 32], strides = [1, 1]} : vector<8x96xf32> to vector<1x32xf32>
    %35 = vector.extract_strided_slice %32 {offsets = [2, 0], sizes = [1, 32], strides = [1, 1]} : vector<8x96xf32> to vector<1x32xf32>
    %36 = vector.extract_strided_slice %32 {offsets = [3, 0], sizes = [1, 32], strides = [1, 1]} : vector<8x96xf32> to vector<1x32xf32>
    %37 = vector.extract_strided_slice %32 {offsets = [4, 0], sizes = [1, 64], strides = [1, 1]} : vector<8x96xf32> to vector<1x64xf32>
    %38 = vector.extract_strided_slice %32 {offsets = [5, 0], sizes = [1, 32], strides = [1, 1]} : vector<8x96xf32> to vector<1x32xf32>
    %39 = vector.extract_strided_slice %32 {offsets = [6, 0], sizes = [1, 32], strides = [1, 1]} : vector<8x96xf32> to vector<1x32xf32>
    %40 = vector.extract_strided_slice %32 {offsets = [7, 0], sizes = [1, 32], strides = [1, 1]} : vector<8x96xf32> to vector<1x32xf32>
    %c0_14 = arith.constant 0 : index
    %c0_15 = arith.constant 0 : index
    %c0_16 = arith.constant 0 : index
    %41 = vector.load %arg3[%c0_14, %c0_15, %c0_16] : memref<2x32x96xbf16, #tpu.memory_space<vmem>>, vector<1x32x96xbf16>
    %42 = vector.shape_cast %41 : vector<1x32x96xbf16> to vector<32x96xbf16>
    %43 = arith.truncf %26 : vector<8x32xf32> to vector<8x32xbf16>
    %cst_17 = arith.constant dense<0.000000e+00> : vector<8x96xf32>
    %44 = tpu.matmul %43, %42, %cst_17 {dimension_numbers = #tpu.dot_dimension_numbers<[1], [0], [0], [1], [0, 0, 1, 1], [], []>} : vector<8x32xbf16>, vector<32x96xbf16>, vector<8x96xf32> -> vector<8x96xf32>
    %45 = vector.broadcast %33 : vector<1x96xf32> to vector<8x96xf32>
    %46 = arith.addf %44, %45 : vector<8x96xf32>
    %47 = vector.extract_strided_slice %46 {offsets = [0, 0], sizes = [8, 8], strides = [1, 1]} : vector<8x96xf32> to vector<8x8xf32>
    %48 = arith.truncf %47 : vector<8x8xf32> to vector<8x8xbf16>
    %49 = vector.extract_strided_slice %46 {offsets = [0, 32], sizes = [8, 8], strides = [1, 1]} : vector<8x96xf32> to vector<8x8xf32>
    %50 = arith.truncf %49 : vector<8x8xf32> to vector<8x8xbf16>
    %51 = vector.extract_strided_slice %46 {offsets = [0, 64], sizes = [8, 8], strides = [1, 1]} : vector<8x96xf32> to vector<8x8xf32>
    %52 = arith.truncf %51 : vector<8x8xf32> to vector<8x8xbf16>
    %cst_18 = arith.constant dense<0.000000e+00> : vector<8x8xf32>
    %53 = tpu.matmul %48, %50, %cst_18 {dimension_numbers = #tpu.dot_dimension_numbers<[1], [1], [0], [0], [0, 0, 1, 0], [], []>} : vector<8x8xbf16>, vector<8x8xbf16>, vector<8x8xf32> -> vector<8x8xf32>
    %54 = arith.addf %53, %30 : vector<8x8xf32>
    %cst_19 = arith.constant dense<0xFF800000> : vector<8xf32>
    %55 = vector.multi_reduction <maximumf>, %54, %cst_19 [1] : vector<8x8xf32> to vector<8xf32>
    %56 = vector.shape_cast %55 : vector<8xf32> to vector<8x1xf32>
    %57 = vector.broadcast %56 : vector<8x1xf32> to vector<8x8xf32>
    %58 = arith.subf %54, %57 : vector<8x8xf32>
    %59 = math.exp %58 : vector<8x8xf32>
    %cst_20 = arith.constant dense<0.000000e+00> : vector<8xf32>
    %60 = vector.multi_reduction <add>, %59, %cst_20 [1] : vector<8x8xf32> to vector<8xf32>
    %61 = vector.shape_cast %60 : vector<8xf32> to vector<8x1xf32>
    %62 = tpu.reciprocal %61 {approx = true} : vector<8x1xf32> -> vector<8x1xf32>
    %63 = vector.broadcast %62 : vector<8x1xf32> to vector<8x8xf32>
    %64 = arith.mulf %59, %63 : vector<8x8xf32>
    %65 = arith.truncf %64 : vector<8x8xf32> to vector<8x8xbf16>
    %cst_21 = arith.constant dense<0.000000e+00> : vector<8x8xf32>
    %66 = tpu.matmul %65, %52, %cst_21 {dimension_numbers = #tpu.dot_dimension_numbers<[1], [0], [0], [1], [0, 0, 1, 1], [], []>} : vector<8x8xbf16>, vector<8x8xbf16>, vector<8x8xf32> -> vector<8x8xf32>
    %67 = vector.extract_strided_slice %46 {offsets = [0, 8], sizes = [8, 8], strides = [1, 1]} : vector<8x96xf32> to vector<8x8xf32>
    %68 = arith.truncf %67 : vector<8x8xf32> to vector<8x8xbf16>
    %69 = vector.extract_strided_slice %46 {offsets = [0, 40], sizes = [8, 8], strides = [1, 1]} : vector<8x96xf32> to vector<8x8xf32>
    %70 = arith.truncf %69 : vector<8x8xf32> to vector<8x8xbf16>
    %71 = vector.extract_strided_slice %46 {offsets = [0, 72], sizes = [8, 8], strides = [1, 1]} : vector<8x96xf32> to vector<8x8xf32>
    %72 = arith.truncf %71 : vector<8x8xf32> to vector<8x8xbf16>
    %cst_22 = arith.constant dense<0.000000e+00> : vector<8x8xf32>
    %73 = tpu.matmul %68, %70, %cst_22 {dimension_numbers = #tpu.dot_dimension_numbers<[1], [1], [0], [0], [0, 0, 1, 0], [], []>} : vector<8x8xbf16>, vector<8x8xbf16>, vector<8x8xf32> -> vector<8x8xf32>
    %74 = arith.addf %73, %30 : vector<8x8xf32>
    %cst_23 = arith.constant dense<0xFF800000> : vector<8xf32>
    %75 = vector.multi_reduction <maximumf>, %74, %cst_23 [1] : vector<8x8xf32> to vector<8xf32>
    %76 = vector.shape_cast %75 : vector<8xf32> to vector<8x1xf32>
    %77 = vector.broadcast %76 : vector<8x1xf32> to vector<8x8xf32>
    %78 = arith.subf %74, %77 : vector<8x8xf32>
    %79 = math.exp %78 : vector<8x8xf32>
    %cst_24 = arith.constant dense<0.000000e+00> : vector<8xf32>
    %80 = vector.multi_reduction <add>, %79, %cst_24 [1] : vector<8x8xf32> to vector<8xf32>
    %81 = vector.shape_cast %80 : vector<8xf32> to vector<8x1xf32>
    %82 = tpu.reciprocal %81 {approx = true} : vector<8x1xf32> -> vector<8x1xf32>
    %83 = vector.broadcast %82 : vector<8x1xf32> to vector<8x8xf32>
    %84 = arith.mulf %79, %83 : vector<8x8xf32>
    %85 = arith.truncf %84 : vector<8x8xf32> to vector<8x8xbf16>
    %cst_25 = arith.constant dense<0.000000e+00> : vector<8x8xf32>
    %86 = tpu.matmul %85, %72, %cst_25 {dimension_numbers = #tpu.dot_dimension_numbers<[1], [0], [0], [1], [0, 0, 1, 1], [], []>} : vector<8x8xbf16>, vector<8x8xbf16>, vector<8x8xf32> -> vector<8x8xf32>
    %87 = vector.extract_strided_slice %46 {offsets = [0, 16], sizes = [8, 8], strides = [1, 1]} : vector<8x96xf32> to vector<8x8xf32>
    %88 = arith.truncf %87 : vector<8x8xf32> to vector<8x8xbf16>
    %89 = vector.extract_strided_slice %46 {offsets = [0, 48], sizes = [8, 8], strides = [1, 1]} : vector<8x96xf32> to vector<8x8xf32>
    %90 = arith.truncf %89 : vector<8x8xf32> to vector<8x8xbf16>
    %91 = vector.extract_strided_slice %46 {offsets = [0, 80], sizes = [8, 8], strides = [1, 1]} : vector<8x96xf32> to vector<8x8xf32>
    %92 = arith.truncf %91 : vector<8x8xf32> to vector<8x8xbf16>
    %cst_26 = arith.constant dense<0.000000e+00> : vector<8x8xf32>
    %93 = tpu.matmul %88, %90, %cst_26 {dimension_numbers = #tpu.dot_dimension_numbers<[1], [1], [0], [0], [0, 0, 1, 0], [], []>} : vector<8x8xbf16>, vector<8x8xbf16>, vector<8x8xf32> -> vector<8x8xf32>
    %94 = arith.addf %93, %30 : vector<8x8xf32>
    %cst_27 = arith.constant dense<0xFF800000> : vector<8xf32>
    %95 = vector.multi_reduction <maximumf>, %94, %cst_27 [1] : vector<8x8xf32> to vector<8xf32>
    %96 = vector.shape_cast %95 : vector<8xf32> to vector<8x1xf32>
    %97 = vector.broadcast %96 : vector<8x1xf32> to vector<8x8xf32>
    %98 = arith.subf %94, %97 : vector<8x8xf32>
    %99 = math.exp %98 : vector<8x8xf32>
    %cst_28 = arith.constant dense<0.000000e+00> : vector<8xf32>
    %100 = vector.multi_reduction <add>, %99, %cst_28 [1] : vector<8x8xf32> to vector<8xf32>
    %101 = vector.shape_cast %100 : vector<8xf32> to vector<8x1xf32>
    %102 = tpu.reciprocal %101 {approx = true} : vector<8x1xf32> -> vector<8x1xf32>
    %103 = vector.broadcast %102 : vector<8x1xf32> to vector<8x8xf32>
    %104 = arith.mulf %99, %103 : vector<8x8xf32>
    %105 = arith.truncf %104 : vector<8x8xf32> to vector<8x8xbf16>
    %cst_29 = arith.constant dense<0.000000e+00> : vector<8x8xf32>
    %106 = tpu.matmul %105, %92, %cst_29 {dimension_numbers = #tpu.dot_dimension_numbers<[1], [0], [0], [1], [0, 0, 1, 1], [], []>} : vector<8x8xbf16>, vector<8x8xbf16>, vector<8x8xf32> -> vector<8x8xf32>
    %107 = vector.extract_strided_slice %46 {offsets = [0, 24], sizes = [8, 8], strides = [1, 1]} : vector<8x96xf32> to vector<8x8xf32>
    %108 = arith.truncf %107 : vector<8x8xf32> to vector<8x8xbf16>
    %109 = vector.extract_strided_slice %46 {offsets = [0, 56], sizes = [8, 8], strides = [1, 1]} : vector<8x96xf32> to vector<8x8xf32>
    %110 = arith.truncf %109 : vector<8x8xf32> to vector<8x8xbf16>
    %111 = vector.extract_strided_slice %46 {offsets = [0, 88], sizes = [8, 8], strides = [1, 1]} : vector<8x96xf32> to vector<8x8xf32>
    %112 = arith.truncf %111 : vector<8x8xf32> to vector<8x8xbf16>
    %cst_30 = arith.constant dense<0.000000e+00> : vector<8x8xf32>
    %113 = tpu.matmul %108, %110, %cst_30 {dimension_numbers = #tpu.dot_dimension_numbers<[1], [1], [0], [0], [0, 0, 1, 0], [], []>} : vector<8x8xbf16>, vector<8x8xbf16>, vector<8x8xf32> -> vector<8x8xf32>
    %114 = arith.addf %113, %30 : vector<8x8xf32>
    %cst_31 = arith.constant dense<0xFF800000> : vector<8xf32>
    %115 = vector.multi_reduction <maximumf>, %114, %cst_31 [1] : vector<8x8xf32> to vector<8xf32>
    %116 = vector.shape_cast %115 : vector<8xf32> to vector<8x1xf32>
    %117 = vector.broadcast %116 : vector<8x1xf32> to vector<8x8xf32>
    %118 = arith.subf %114, %117 : vector<8x8xf32>
    %119 = math.exp %118 : vector<8x8xf32>
    %cst_32 = arith.constant dense<0.000000e+00> : vector<8xf32>
    %120 = vector.multi_reduction <add>, %119, %cst_32 [1] : vector<8x8xf32> to vector<8xf32>
    %121 = vector.shape_cast %120 : vector<8xf32> to vector<8x1xf32>
    %122 = tpu.reciprocal %121 {approx = true} : vector<8x1xf32> -> vector<8x1xf32>
    %123 = vector.broadcast %122 : vector<8x1xf32> to vector<8x8xf32>
    %124 = arith.mulf %119, %123 : vector<8x8xf32>
    %125 = arith.truncf %124 : vector<8x8xf32> to vector<8x8xbf16>
    %cst_33 = arith.constant dense<0.000000e+00> : vector<8x8xf32>
    %126 = tpu.matmul %125, %112, %cst_33 {dimension_numbers = #tpu.dot_dimension_numbers<[1], [0], [0], [1], [0, 0, 1, 1], [], []>} : vector<8x8xbf16>, vector<8x8xbf16>, vector<8x8xf32> -> vector<8x8xf32>
    %127 = tpu.concatenate %66, %86, %106, %126 in 1 : vector<8x8xf32>, vector<8x8xf32>, vector<8x8xf32>, vector<8x8xf32> -> vector<8x32xf32>
    %c0_34 = arith.constant 0 : index
    %c0_35 = arith.constant 0 : index
    %c0_36 = arith.constant 0 : index
    %128 = vector.load %arg4[%c0_34, %c0_35, %c0_36] : memref<2x32x32xbf16, #tpu.memory_space<vmem>>, vector<1x32x32xbf16>
    %129 = vector.shape_cast %128 : vector<1x32x32xbf16> to vector<32x32xbf16>
    %130 = arith.truncf %127 : vector<8x32xf32> to vector<8x32xbf16>
    %cst_37 = arith.constant dense<0.000000e+00> : vector<8x32xf32>
    %131 = tpu.matmul %130, %129, %cst_37 {dimension_numbers = #tpu.dot_dimension_numbers<[1], [0], [0], [1], [0, 0, 1, 1], [], []>} : vector<8x32xbf16>, vector<32x32xbf16>, vector<8x32xf32> -> vector<8x32xf32>
    %132 = vector.broadcast %34 : vector<1x32xf32> to vector<8x32xf32>
    %133 = arith.addf %131, %132 : vector<8x32xf32>
    %134 = arith.addf %133, %26 : vector<8x32xf32>
    %cst_38 = arith.constant dense<0.000000e+00> : vector<8xf32>
    %135 = vector.multi_reduction <add>, %134, %cst_38 [1] : vector<8x32xf32> to vector<8xf32>
    %136 = vector.shape_cast %135 : vector<8xf32> to vector<8x1xf32>
    %cst_39 = arith.constant 3.200000e+01 : f32
    %137 = vector.broadcast %cst_39 : f32 to vector<8x1xf32>
    %138 = arith.divf %136, %137 : vector<8x1xf32>
    %139 = vector.broadcast %138 : vector<8x1xf32> to vector<8x32xf32>
    %140 = arith.subf %134, %139 : vector<8x32xf32>
    %141 = arith.mulf %140, %140 : vector<8x32xf32>
    %cst_40 = arith.constant dense<0.000000e+00> : vector<8xf32>
    %142 = vector.multi_reduction <add>, %141, %cst_40 [1] : vector<8x32xf32> to vector<8xf32>
    %143 = vector.shape_cast %142 : vector<8xf32> to vector<8x1xf32>
    %cst_41 = arith.constant 3.200000e+01 : f32
    %144 = vector.broadcast %cst_41 : f32 to vector<8x1xf32>
    %145 = arith.divf %143, %144 : vector<8x1xf32>
    %cst_42 = arith.constant 9.99999996E-13 : f32
    %146 = vector.broadcast %cst_42 : f32 to vector<8x1xf32>
    %147 = arith.addf %145, %146 : vector<8x1xf32>
    %148 = math.rsqrt %147 : vector<8x1xf32>
    %149 = vector.broadcast %148 : vector<8x1xf32> to vector<8x32xf32>
    %150 = arith.mulf %140, %149 : vector<8x32xf32>
    %151 = vector.broadcast %35 : vector<1x32xf32> to vector<8x32xf32>
    %152 = arith.mulf %150, %151 : vector<8x32xf32>
    %153 = vector.broadcast %36 : vector<1x32xf32> to vector<8x32xf32>
    %154 = arith.addf %152, %153 : vector<8x32xf32>
    %c0_43 = arith.constant 0 : index
    %c0_44 = arith.constant 0 : index
    %c0_45 = arith.constant 0 : index
    %155 = vector.load %arg5[%c0_43, %c0_44, %c0_45] : memref<2x32x64xbf16, #tpu.memory_space<vmem>>, vector<1x32x64xbf16>
    %156 = vector.shape_cast %155 : vector<1x32x64xbf16> to vector<32x64xbf16>
    %157 = arith.truncf %154 : vector<8x32xf32> to vector<8x32xbf16>
    %cst_46 = arith.constant dense<0.000000e+00> : vector<8x64xf32>
    %158 = tpu.matmul %157, %156, %cst_46 {dimension_numbers = #tpu.dot_dimension_numbers<[1], [0], [0], [1], [0, 0, 1, 1], [], []>} : vector<8x32xbf16>, vector<32x64xbf16>, vector<8x64xf32> -> vector<8x64xf32>
    %159 = vector.broadcast %37 : vector<1x64xf32> to vector<8x64xf32>
    %160 = arith.addf %158, %159 : vector<8x64xf32>
    %cst_47 = arith.constant 5.000000e-01 : f32
    %161 = vector.broadcast %cst_47 : f32 to vector<8x64xf32>
    %162 = arith.mulf %161, %160 : vector<8x64xf32>
    %cst_48 = arith.constant 4.471500e-02 : f32
    %163 = vector.broadcast %cst_48 : f32 to vector<8x64xf32>
    %164 = arith.mulf %163, %160 : vector<8x64xf32>
    %165 = arith.mulf %164, %160 : vector<8x64xf32>
    %166 = arith.mulf %165, %160 : vector<8x64xf32>
    %167 = arith.addf %160, %166 : vector<8x64xf32>
    %cst_49 = arith.constant 0.797884583 : f32
    %168 = vector.broadcast %cst_49 : f32 to vector<8x64xf32>
    %169 = arith.mulf %168, %167 : vector<8x64xf32>
    %170 = math.tanh %169 : vector<8x64xf32>
    %cst_50 = arith.constant 1.000000e+00 : f32
    %171 = vector.broadcast %cst_50 : f32 to vector<8x64xf32>
    %172 = arith.addf %171, %170 : vector<8x64xf32>
    %173 = arith.mulf %162, %172 : vector<8x64xf32>
    %c0_51 = arith.constant 0 : index
    %c0_52 = arith.constant 0 : index
    %c0_53 = arith.constant 0 : index
    %174 = vector.load %arg6[%c0_51, %c0_52, %c0_53] : memref<2x64x32xbf16, #tpu.memory_space<vmem>>, vector<1x64x32xbf16>
    %175 = vector.shape_cast %174 : vector<1x64x32xbf16> to vector<64x32xbf16>
    %176 = arith.truncf %173 : vector<8x64xf32> to vector<8x64xbf16>
    %cst_54 = arith.constant dense<0.000000e+00> : vector<8x32xf32>
    %177 = tpu.matmul %176, %175, %cst_54 {dimension_numbers = #tpu.dot_dimension_numbers<[1], [0], [0], [1], [0, 0, 1, 1], [], []>} : vector<8x64xbf16>, vector<64x32xbf16>, vector<8x32xf32> -> vector<8x32xf32>
    %178 = vector.broadcast %38 : vector<1x32xf32> to vector<8x32xf32>
    %179 = arith.addf %177, %178 : vector<8x32xf32>
    %180 = arith.addf %179, %154 : vector<8x32xf32>
    %cst_55 = arith.constant dense<0.000000e+00> : vector<8xf32>
    %181 = vector.multi_reduction <add>, %180, %cst_55 [1] : vector<8x32xf32> to vector<8xf32>
    %182 = vector.shape_cast %181 : vector<8xf32> to vector<8x1xf32>
    %cst_56 = arith.constant 3.200000e+01 : f32
    %183 = vector.broadcast %cst_56 : f32 to vector<8x1xf32>
    %184 = arith.divf %182, %183 : vector<8x1xf32>
    %185 = vector.broadcast %184 : vector<8x1xf32> to vector<8x32xf32>
    %186 = arith.subf %180, %185 : vector<8x32xf32>
    %187 = arith.mulf %186, %186 : vector<8x32xf32>
    %cst_57 = arith.constant dense<0.000000e+00> : vector<8xf32>
    %188 = vector.multi_reduction <add>, %187, %cst_57 [1] : vector<8x32xf32> to vector<8xf32>
    %189 = vector.shape_cast %188 : vector<8xf32> to vector<8x1xf32>
    %cst_58 = arith.constant 3.200000e+01 : f32
    %190 = vector.broadcast %cst_58 : f32 to vector<8x1xf32>
    %191 = arith.divf %189, %190 : vector<8x1xf32>
    %cst_59 = arith.constant 9.99999996E-13 : f32
    %192 = vector.broadcast %cst_59 : f32 to vector<8x1xf32>
    %193 = arith.addf %191, %192 : vector<8x1xf32>
    %194 = math.rsqrt %193 : vector<8x1xf32>
    %195 = vector.broadcast %194 : vector<8x1xf32> to vector<8x32xf32>
    %196 = arith.mulf %186, %195 : vector<8x32xf32>
    %197 = vector.broadcast %39 : vector<1x32xf32> to vector<8x32xf32>
    %198 = arith.mulf %196, %197 : vector<8x32xf32>
    %199 = vector.broadcast %40 : vector<1x32xf32> to vector<8x32xf32>
    %200 = arith.addf %198, %199 : vector<8x32xf32>
    %c1 = arith.constant 1 : index
    %c0_60 = arith.constant 0 : index
    %c0_61 = arith.constant 0 : index
    %201 = vector.load %arg7[%c1, %c0_60, %c0_61] : memref<2x8x96xf32, #tpu.memory_space<vmem>>, vector<1x8x96xf32>
    %202 = vector.shape_cast %201 : vector<1x8x96xf32> to vector<8x96xf32>
    %203 = vector.extract_strided_slice %202 {offsets = [0, 0], sizes = [1, 96], strides = [1, 1]} : vector<8x96xf32> to vector<1x96xf32>
    %204 = vector.extract_strided_slice %202 {offsets = [1, 0], sizes = [1, 32], strides = [1, 1]} : vector<8x96xf32> to vector<1x32xf32>
    %205 = vector.extract_strided_slice %202 {offsets = [2, 0], sizes = [1, 32], strides = [1, 1]} : vector<8x96xf32> to vector<1x32xf32>
    %206 = vector.extract_strided_slice %202 {offsets = [3, 0], sizes = [1, 32], strides = [1, 1]} : vector<8x96xf32> to vector<1x32xf32>
    %207 = vector.extract_strided_slice %202 {offsets = [4, 0], sizes = [1, 64], strides = [1, 1]} : vector<8x96xf32> to vector<1x64xf32>
    %208 = vector.extract_strided_slice %202 {offsets = [5, 0], sizes = [1, 32], strides = [1, 1]} : vector<8x96xf32> to vector<1x32xf32>
    %209 = vector.extract_strided_slice %202 {offsets = [6, 0], sizes = [1, 32], strides = [1, 1]} : vector<8x96xf32> to vector<1x32xf32>
    %210 = vector.extract_strided_slice %202 {offsets = [7, 0], sizes = [1, 32], strides = [1, 1]} : vector<8x96xf32> to vector<1x32xf32>
    %c1_62 = arith.constant 1 : index
    %c0_63 = arith.constant 0 : index
    %c0_64 = arith.constant 0 : index
    %211 = vector.load %arg3[%c1_62, %c0_63, %c0_64] : memref<2x32x96xbf16, #tpu.memory_space<vmem>>, vector<1x32x96xbf16>
    %212 = vector.shape_cast %211 : vector<1x32x96xbf16> to vector<32x96xbf16>
    %213 = arith.truncf %200 : vector<8x32xf32> to vector<8x32xbf16>
    %cst_65 = arith.constant dense<0.000000e+00> : vector<8x96xf32>
    %214 = tpu.matmul %213, %212, %cst_65 {dimension_numbers = #tpu.dot_dimension_numbers<[1], [0], [0], [1], [0, 0, 1, 1], [], []>} : vector<8x32xbf16>, vector<32x96xbf16>, vector<8x96xf32> -> vector<8x96xf32>
    %215 = vector.broadcast %203 : vector<1x96xf32> to vector<8x96xf32>
    %216 = arith.addf %214, %215 : vector<8x96xf32>
    %217 = vector.extract_strided_slice %216 {offsets = [0, 0], sizes = [8, 8], strides = [1, 1]} : vector<8x96xf32> to vector<8x8xf32>
    %218 = arith.truncf %217 : vector<8x8xf32> to vector<8x8xbf16>
    %219 = vector.extract_strided_slice %216 {offsets = [0, 32], sizes = [8, 8], strides = [1, 1]} : vector<8x96xf32> to vector<8x8xf32>
    %220 = arith.truncf %219 : vector<8x8xf32> to vector<8x8xbf16>
    %221 = vector.extract_strided_slice %216 {offsets = [0, 64], sizes = [8, 8], strides = [1, 1]} : vector<8x96xf32> to vector<8x8xf32>
    %222 = arith.truncf %221 : vector<8x8xf32> to vector<8x8xbf16>
    %cst_66 = arith.constant dense<0.000000e+00> : vector<8x8xf32>
    %223 = tpu.matmul %218, %220, %cst_66 {dimension_numbers = #tpu.dot_dimension_numbers<[1], [1], [0], [0], [0, 0, 1, 0], [], []>} : vector<8x8xbf16>, vector<8x8xbf16>, vector<8x8xf32> -> vector<8x8xf32>
    %224 = arith.addf %223, %30 : vector<8x8xf32>
    %cst_67 = arith.constant dense<0xFF800000> : vector<8xf32>
    %225 = vector.multi_reduction <maximumf>, %224, %cst_67 [1] : vector<8x8xf32> to vector<8xf32>
    %226 = vector.shape_cast %225 : vector<8xf32> to vector<8x1xf32>
    %227 = vector.broadcast %226 : vector<8x1xf32> to vector<8x8xf32>
    %228 = arith.subf %224, %227 : vector<8x8xf32>
    %229 = math.exp %228 : vector<8x8xf32>
    %cst_68 = arith.constant dense<0.000000e+00> : vector<8xf32>
    %230 = vector.multi_reduction <add>, %229, %cst_68 [1] : vector<8x8xf32> to vector<8xf32>
    %231 = vector.shape_cast %230 : vector<8xf32> to vector<8x1xf32>
    %232 = tpu.reciprocal %231 {approx = true} : vector<8x1xf32> -> vector<8x1xf32>
    %233 = vector.broadcast %232 : vector<8x1xf32> to vector<8x8xf32>
    %234 = arith.mulf %229, %233 : vector<8x8xf32>
    %235 = arith.truncf %234 : vector<8x8xf32> to vector<8x8xbf16>
    %cst_69 = arith.constant dense<0.000000e+00> : vector<8x8xf32>
    %236 = tpu.matmul %235, %222, %cst_69 {dimension_numbers = #tpu.dot_dimension_numbers<[1], [0], [0], [1], [0, 0, 1, 1], [], []>} : vector<8x8xbf16>, vector<8x8xbf16>, vector<8x8xf32> -> vector<8x8xf32>
    %237 = vector.extract_strided_slice %216 {offsets = [0, 8], sizes = [8, 8], strides = [1, 1]} : vector<8x96xf32> to vector<8x8xf32>
    %238 = arith.truncf %237 : vector<8x8xf32> to vector<8x8xbf16>
    %239 = vector.extract_strided_slice %216 {offsets = [0, 40], sizes = [8, 8], strides = [1, 1]} : vector<8x96xf32> to vector<8x8xf32>
    %240 = arith.truncf %239 : vector<8x8xf32> to vector<8x8xbf16>
    %241 = vector.extract_strided_slice %216 {offsets = [0, 72], sizes = [8, 8], strides = [1, 1]} : vector<8x96xf32> to vector<8x8xf32>
    %242 = arith.truncf %241 : vector<8x8xf32> to vector<8x8xbf16>
    %cst_70 = arith.constant dense<0.000000e+00> : vector<8x8xf32>
    %243 = tpu.matmul %238, %240, %cst_70 {dimension_numbers = #tpu.dot_dimension_numbers<[1], [1], [0], [0], [0, 0, 1, 0], [], []>} : vector<8x8xbf16>, vector<8x8xbf16>, vector<8x8xf32> -> vector<8x8xf32>
    %244 = arith.addf %243, %30 : vector<8x8xf32>
    %cst_71 = arith.constant dense<0xFF800000> : vector<8xf32>
    %245 = vector.multi_reduction <maximumf>, %244, %cst_71 [1] : vector<8x8xf32> to vector<8xf32>
    %246 = vector.shape_cast %245 : vector<8xf32> to vector<8x1xf32>
    %247 = vector.broadcast %246 : vector<8x1xf32> to vector<8x8xf32>
    %248 = arith.subf %244, %247 : vector<8x8xf32>
    %249 = math.exp %248 : vector<8x8xf32>
    %cst_72 = arith.constant dense<0.000000e+00> : vector<8xf32>
    %250 = vector.multi_reduction <add>, %249, %cst_72 [1] : vector<8x8xf32> to vector<8xf32>
    %251 = vector.shape_cast %250 : vector<8xf32> to vector<8x1xf32>
    %252 = tpu.reciprocal %251 {approx = true} : vector<8x1xf32> -> vector<8x1xf32>
    %253 = vector.broadcast %252 : vector<8x1xf32> to vector<8x8xf32>
    %254 = arith.mulf %249, %253 : vector<8x8xf32>
    %255 = arith.truncf %254 : vector<8x8xf32> to vector<8x8xbf16>
    %cst_73 = arith.constant dense<0.000000e+00> : vector<8x8xf32>
    %256 = tpu.matmul %255, %242, %cst_73 {dimension_numbers = #tpu.dot_dimension_numbers<[1], [0], [0], [1], [0, 0, 1, 1], [], []>} : vector<8x8xbf16>, vector<8x8xbf16>, vector<8x8xf32> -> vector<8x8xf32>
    %257 = vector.extract_strided_slice %216 {offsets = [0, 16], sizes = [8, 8], strides = [1, 1]} : vector<8x96xf32> to vector<8x8xf32>
    %258 = arith.truncf %257 : vector<8x8xf32> to vector<8x8xbf16>
    %259 = vector.extract_strided_slice %216 {offsets = [0, 48], sizes = [8, 8], strides = [1, 1]} : vector<8x96xf32> to vector<8x8xf32>
    %260 = arith.truncf %259 : vector<8x8xf32> to vector<8x8xbf16>
    %261 = vector.extract_strided_slice %216 {offsets = [0, 80], sizes = [8, 8], strides = [1, 1]} : vector<8x96xf32> to vector<8x8xf32>
    %262 = arith.truncf %261 : vector<8x8xf32> to vector<8x8xbf16>
    %cst_74 = arith.constant dense<0.000000e+00> : vector<8x8xf32>
    %263 = tpu.matmul %258, %260, %cst_74 {dimension_numbers = #tpu.dot_dimension_numbers<[1], [1], [0], [0], [0, 0, 1, 0], [], []>} : vector<8x8xbf16>, vector<8x8xbf16>, vector<8x8xf32> -> vector<8x8xf32>
    %264 = arith.addf %263, %30 : vector<8x8xf32>
    %cst_75 = arith.constant dense<0xFF800000> : vector<8xf32>
    %265 = vector.multi_reduction <maximumf>, %264, %cst_75 [1] : vector<8x8xf32> to vector<8xf32>
    %266 = vector.shape_cast %265 : vector<8xf32> to vector<8x1xf32>
    %267 = vector.broadcast %266 : vector<8x1xf32> to vector<8x8xf32>
    %268 = arith.subf %264, %267 : vector<8x8xf32>
    %269 = math.exp %268 : vector<8x8xf32>
    %cst_76 = arith.constant dense<0.000000e+00> : vector<8xf32>
    %270 = vector.multi_reduction <add>, %269, %cst_76 [1] : vector<8x8xf32> to vector<8xf32>
    %271 = vector.shape_cast %270 : vector<8xf32> to vector<8x1xf32>
    %272 = tpu.reciprocal %271 {approx = true} : vector<8x1xf32> -> vector<8x1xf32>
    %273 = vector.broadcast %272 : vector<8x1xf32> to vector<8x8xf32>
    %274 = arith.mulf %269, %273 : vector<8x8xf32>
    %275 = arith.truncf %274 : vector<8x8xf32> to vector<8x8xbf16>
    %cst_77 = arith.constant dense<0.000000e+00> : vector<8x8xf32>
    %276 = tpu.matmul %275, %262, %cst_77 {dimension_numbers = #tpu.dot_dimension_numbers<[1], [0], [0], [1], [0, 0, 1, 1], [], []>} : vector<8x8xbf16>, vector<8x8xbf16>, vector<8x8xf32> -> vector<8x8xf32>
    %277 = vector.extract_strided_slice %216 {offsets = [0, 24], sizes = [8, 8], strides = [1, 1]} : vector<8x96xf32> to vector<8x8xf32>
    %278 = arith.truncf %277 : vector<8x8xf32> to vector<8x8xbf16>
    %279 = vector.extract_strided_slice %216 {offsets = [0, 56], sizes = [8, 8], strides = [1, 1]} : vector<8x96xf32> to vector<8x8xf32>
    %280 = arith.truncf %279 : vector<8x8xf32> to vector<8x8xbf16>
    %281 = vector.extract_strided_slice %216 {offsets = [0, 88], sizes = [8, 8], strides = [1, 1]} : vector<8x96xf32> to vector<8x8xf32>
    %282 = arith.truncf %281 : vector<8x8xf32> to vector<8x8xbf16>
    %cst_78 = arith.constant dense<0.000000e+00> : vector<8x8xf32>
    %283 = tpu.matmul %278, %280, %cst_78 {dimension_numbers = #tpu.dot_dimension_numbers<[1], [1], [0], [0], [0, 0, 1, 0], [], []>} : vector<8x8xbf16>, vector<8x8xbf16>, vector<8x8xf32> -> vector<8x8xf32>
    %284 = arith.addf %283, %30 : vector<8x8xf32>
    %cst_79 = arith.constant dense<0xFF800000> : vector<8xf32>
    %285 = vector.multi_reduction <maximumf>, %284, %cst_79 [1] : vector<8x8xf32> to vector<8xf32>
    %286 = vector.shape_cast %285 : vector<8xf32> to vector<8x1xf32>
    %287 = vector.broadcast %286 : vector<8x1xf32> to vector<8x8xf32>
    %288 = arith.subf %284, %287 : vector<8x8xf32>
    %289 = math.exp %288 : vector<8x8xf32>
    %cst_80 = arith.constant dense<0.000000e+00> : vector<8xf32>
    %290 = vector.multi_reduction <add>, %289, %cst_80 [1] : vector<8x8xf32> to vector<8xf32>
    %291 = vector.shape_cast %290 : vector<8xf32> to vector<8x1xf32>
    %292 = tpu.reciprocal %291 {approx = true} : vector<8x1xf32> -> vector<8x1xf32>
    %293 = vector.broadcast %292 : vector<8x1xf32> to vector<8x8xf32>
    %294 = arith.mulf %289, %293 : vector<8x8xf32>
    %295 = arith.truncf %294 : vector<8x8xf32> to vector<8x8xbf16>
    %cst_81 = arith.constant dense<0.000000e+00> : vector<8x8xf32>
    %296 = tpu.matmul %295, %282, %cst_81 {dimension_numbers = #tpu.dot_dimension_numbers<[1], [0], [0], [1], [0, 0, 1, 1], [], []>} : vector<8x8xbf16>, vector<8x8xbf16>, vector<8x8xf32> -> vector<8x8xf32>
    %297 = tpu.concatenate %236, %256, %276, %296 in 1 : vector<8x8xf32>, vector<8x8xf32>, vector<8x8xf32>, vector<8x8xf32> -> vector<8x32xf32>
    %c1_82 = arith.constant 1 : index
    %c0_83 = arith.constant 0 : index
    %c0_84 = arith.constant 0 : index
    %298 = vector.load %arg4[%c1_82, %c0_83, %c0_84] : memref<2x32x32xbf16, #tpu.memory_space<vmem>>, vector<1x32x32xbf16>
    %299 = vector.shape_cast %298 : vector<1x32x32xbf16> to vector<32x32xbf16>
    %300 = arith.truncf %297 : vector<8x32xf32> to vector<8x32xbf16>
    %cst_85 = arith.constant dense<0.000000e+00> : vector<8x32xf32>
    %301 = tpu.matmul %300, %299, %cst_85 {dimension_numbers = #tpu.dot_dimension_numbers<[1], [0], [0], [1], [0, 0, 1, 1], [], []>} : vector<8x32xbf16>, vector<32x32xbf16>, vector<8x32xf32> -> vector<8x32xf32>
    %302 = vector.broadcast %204 : vector<1x32xf32> to vector<8x32xf32>
    %303 = arith.addf %301, %302 : vector<8x32xf32>
    %304 = arith.addf %303, %200 : vector<8x32xf32>
    %cst_86 = arith.constant dense<0.000000e+00> : vector<8xf32>
    %305 = vector.multi_reduction <add>, %304, %cst_86 [1] : vector<8x32xf32> to vector<8xf32>
    %306 = vector.shape_cast %305 : vector<8xf32> to vector<8x1xf32>
    %cst_87 = arith.constant 3.200000e+01 : f32
    %307 = vector.broadcast %cst_87 : f32 to vector<8x1xf32>
    %308 = arith.divf %306, %307 : vector<8x1xf32>
    %309 = vector.broadcast %308 : vector<8x1xf32> to vector<8x32xf32>
    %310 = arith.subf %304, %309 : vector<8x32xf32>
    %311 = arith.mulf %310, %310 : vector<8x32xf32>
    %cst_88 = arith.constant dense<0.000000e+00> : vector<8xf32>
    %312 = vector.multi_reduction <add>, %311, %cst_88 [1] : vector<8x32xf32> to vector<8xf32>
    %313 = vector.shape_cast %312 : vector<8xf32> to vector<8x1xf32>
    %cst_89 = arith.constant 3.200000e+01 : f32
    %314 = vector.broadcast %cst_89 : f32 to vector<8x1xf32>
    %315 = arith.divf %313, %314 : vector<8x1xf32>
    %cst_90 = arith.constant 9.99999996E-13 : f32
    %316 = vector.broadcast %cst_90 : f32 to vector<8x1xf32>
    %317 = arith.addf %315, %316 : vector<8x1xf32>
    %318 = math.rsqrt %317 : vector<8x1xf32>
    %319 = vector.broadcast %318 : vector<8x1xf32> to vector<8x32xf32>
    %320 = arith.mulf %310, %319 : vector<8x32xf32>
    %321 = vector.broadcast %205 : vector<1x32xf32> to vector<8x32xf32>
    %322 = arith.mulf %320, %321 : vector<8x32xf32>
    %323 = vector.broadcast %206 : vector<1x32xf32> to vector<8x32xf32>
    %324 = arith.addf %322, %323 : vector<8x32xf32>
    %c1_91 = arith.constant 1 : index
    %c0_92 = arith.constant 0 : index
    %c0_93 = arith.constant 0 : index
    %325 = vector.load %arg5[%c1_91, %c0_92, %c0_93] : memref<2x32x64xbf16, #tpu.memory_space<vmem>>, vector<1x32x64xbf16>
    %326 = vector.shape_cast %325 : vector<1x32x64xbf16> to vector<32x64xbf16>
    %327 = arith.truncf %324 : vector<8x32xf32> to vector<8x32xbf16>
    %cst_94 = arith.constant dense<0.000000e+00> : vector<8x64xf32>
    %328 = tpu.matmul %327, %326, %cst_94 {dimension_numbers = #tpu.dot_dimension_numbers<[1], [0], [0], [1], [0, 0, 1, 1], [], []>} : vector<8x32xbf16>, vector<32x64xbf16>, vector<8x64xf32> -> vector<8x64xf32>
    %329 = vector.broadcast %207 : vector<1x64xf32> to vector<8x64xf32>
    %330 = arith.addf %328, %329 : vector<8x64xf32>
    %cst_95 = arith.constant 5.000000e-01 : f32
    %331 = vector.broadcast %cst_95 : f32 to vector<8x64xf32>
    %332 = arith.mulf %331, %330 : vector<8x64xf32>
    %cst_96 = arith.constant 4.471500e-02 : f32
    %333 = vector.broadcast %cst_96 : f32 to vector<8x64xf32>
    %334 = arith.mulf %333, %330 : vector<8x64xf32>
    %335 = arith.mulf %334, %330 : vector<8x64xf32>
    %336 = arith.mulf %335, %330 : vector<8x64xf32>
    %337 = arith.addf %330, %336 : vector<8x64xf32>
    %cst_97 = arith.constant 0.797884583 : f32
    %338 = vector.broadcast %cst_97 : f32 to vector<8x64xf32>
    %339 = arith.mulf %338, %337 : vector<8x64xf32>
    %340 = math.tanh %339 : vector<8x64xf32>
    %cst_98 = arith.constant 1.000000e+00 : f32
    %341 = vector.broadcast %cst_98 : f32 to vector<8x64xf32>
    %342 = arith.addf %341, %340 : vector<8x64xf32>
    %343 = arith.mulf %332, %342 : vector<8x64xf32>
    %c1_99 = arith.constant 1 : index
    %c0_100 = arith.constant 0 : index
    %c0_101 = arith.constant 0 : index
    %344 = vector.load %arg6[%c1_99, %c0_100, %c0_101] : memref<2x64x32xbf16, #tpu.memory_space<vmem>>, vector<1x64x32xbf16>
    %345 = vector.shape_cast %344 : vector<1x64x32xbf16> to vector<64x32xbf16>
    %346 = arith.truncf %343 : vector<8x64xf32> to vector<8x64xbf16>
    %cst_102 = arith.constant dense<0.000000e+00> : vector<8x32xf32>
    %347 = tpu.matmul %346, %345, %cst_102 {dimension_numbers = #tpu.dot_dimension_numbers<[1], [0], [0], [1], [0, 0, 1, 1], [], []>} : vector<8x64xbf16>, vector<64x32xbf16>, vector<8x32xf32> -> vector<8x32xf32>
    %348 = vector.broadcast %208 : vector<1x32xf32> to vector<8x32xf32>
    %349 = arith.addf %347, %348 : vector<8x32xf32>
    %350 = arith.addf %349, %324 : vector<8x32xf32>
    %cst_103 = arith.constant dense<0.000000e+00> : vector<8xf32>
    %351 = vector.multi_reduction <add>, %350, %cst_103 [1] : vector<8x32xf32> to vector<8xf32>
    %352 = vector.shape_cast %351 : vector<8xf32> to vector<8x1xf32>
    %cst_104 = arith.constant 3.200000e+01 : f32
    %353 = vector.broadcast %cst_104 : f32 to vector<8x1xf32>
    %354 = arith.divf %352, %353 : vector<8x1xf32>
    %355 = vector.broadcast %354 : vector<8x1xf32> to vector<8x32xf32>
    %356 = arith.subf %350, %355 : vector<8x32xf32>
    %357 = arith.mulf %356, %356 : vector<8x32xf32>
    %cst_105 = arith.constant dense<0.000000e+00> : vector<8xf32>
    %358 = vector.multi_reduction <add>, %357, %cst_105 [1] : vector<8x32xf32> to vector<8xf32>
    %359 = vector.shape_cast %358 : vector<8xf32> to vector<8x1xf32>
    %cst_106 = arith.constant 3.200000e+01 : f32
    %360 = vector.broadcast %cst_106 : f32 to vector<8x1xf32>
    %361 = arith.divf %359, %360 : vector<8x1xf32>
    %cst_107 = arith.constant 9.99999996E-13 : f32
    %362 = vector.broadcast %cst_107 : f32 to vector<8x1xf32>
    %363 = arith.addf %361, %362 : vector<8x1xf32>
    %364 = math.rsqrt %363 : vector<8x1xf32>
    %365 = vector.broadcast %364 : vector<8x1xf32> to vector<8x32xf32>
    %366 = arith.mulf %356, %365 : vector<8x32xf32>
    %367 = vector.broadcast %209 : vector<1x32xf32> to vector<8x32xf32>
    %368 = arith.mulf %366, %367 : vector<8x32xf32>
    %369 = vector.broadcast %210 : vector<1x32xf32> to vector<8x32xf32>
    %370 = arith.addf %368, %369 : vector<8x32xf32>
    %c0_108 = arith.constant 0 : index
    %c0_109 = arith.constant 0 : index
    %371 = vector.load %arg9[%c0_108, %c0_109] : memref<32x32xbf16, #tpu.memory_space<vmem>>, vector<32x32xbf16>
    %372 = arith.truncf %370 : vector<8x32xf32> to vector<8x32xbf16>
    %cst_110 = arith.constant dense<0.000000e+00> : vector<8x32xf32>
    %373 = tpu.matmul %372, %371, %cst_110 {dimension_numbers = #tpu.dot_dimension_numbers<[1], [0], [0], [1], [0, 0, 1, 1], [], []>} : vector<8x32xbf16>, vector<32x32xbf16>, vector<8x32xf32> -> vector<8x32xf32>
    %374 = vector.broadcast %3 : vector<1x32xf32> to vector<8x32xf32>
    %375 = arith.addf %373, %374 : vector<8x32xf32>
    %376 = math.tanh %375 : vector<8x32xf32>
    %c0_111 = arith.constant 0 : index
    %c0_112 = arith.constant 0 : index
    %377 = vector.load %arg10[%c0_111, %c0_112] : memref<32x128xbf16, #tpu.memory_space<vmem>>, vector<32x128xbf16>
    %378 = arith.truncf %376 : vector<8x32xf32> to vector<8x32xbf16>
    %cst_113 = arith.constant dense<0.000000e+00> : vector<8x128xf32>
    %379 = tpu.matmul %378, %377, %cst_113 {dimension_numbers = #tpu.dot_dimension_numbers<[1], [0], [0], [1], [0, 0, 1, 1], [], []>} : vector<8x32xbf16>, vector<32x128xbf16>, vector<8x128xf32> -> vector<8x128xf32>
    %380 = vector.broadcast %4 : vector<1x128xf32> to vector<8x128xf32>
    %381 = arith.addf %379, %380 : vector<8x128xf32>
    %c0_114 = arith.constant 0 : index
    %c0_115 = arith.constant 0 : index
    %c0_116 = arith.constant 0 : index
    %382 = vector.load %arg11[%c0_114, %c0_115, %c0_116] : memref<1x8x128xf32, #tpu.memory_space<vmem>>, vector<1x8x128xf32>
    %383 = vector.shape_cast %382 : vector<1x8x128xf32> to vector<8x128xf32>
    %384 = vector.shape_cast %381 : vector<8x128xf32> to vector<1x8x128xf32>
    tpu.vector_store %arg11[%c0_114, %c0_115, %c0_116], %384 {strides = array<i32>} : memref<1x8x128xf32, #tpu.memory_space<vmem>>, vector<1x8x128xf32>,
    return
  }
  func.func @transform_0(%arg0: i32) -> (i32, i32, i32) {
    %c0_i32 = arith.constant 0 : i32
    %c0_i32_0 = arith.constant 0 : i32
    %c0_i32_1 = arith.constant 0 : i32
    return %arg0, %c0_i32, %c0_i32_0 : i32, i32, i32
  }
  func.func @transform_1(%arg0: i32) -> (i32, i32, i32) {
    %c0_i32 = arith.constant 0 : i32
    %c0_i32_0 = arith.constant 0 : i32
    %c0_i32_1 = arith.constant 0 : i32
    return %arg0, %c0_i32, %c0_i32_0 : i32, i32, i32
  }
  func.func @transform_2(%arg0: i32) -> (i32, i32, i32) {
    %c0_i32 = arith.constant 0 : i32
    %c0_i32_0 = arith.constant 0 : i32
    %c0_i32_1 = arith.constant 0 : i32
    %c0_i32_2 = arith.constant 0 : i32
    return %c0_i32, %c0_i32_0, %c0_i32_1 : i32, i32, i32
  }
  func.func @transform_3(%arg0: i32) -> (i32, i32, i32) {
    %c0_i32 = arith.constant 0 : i32
    %c0_i32_0 = arith.constant 0 : i32
    %c0_i32_1 = arith.constant 0 : i32
    %c0_i32_2 = arith.constant 0 : i32
    return %c0_i32, %c0_i32_0, %c0_i32_1 : i32, i32, i32
  }
  func.func @transform_4(%arg0: i32) -> (i32, i32, i32) {
    %c0_i32 = arith.constant 0 : i32
    %c0_i32_0 = arith.constant 0 : i32
    %c0_i32_1 = arith.constant 0 : i32
    %c0_i32_2 = arith.constant 0 : i32
    return %c0_i32, %c0_i32_0, %c0_i32_1 : i32, i32, i32
  }
  func.func @transform_5(%arg0: i32) -> (i32, i32, i32) {
    %c0_i32 = arith.constant 0 : i32
    %c0_i32_0 = arith.constant 0 : i32
    %c0_i32_1 = arith.constant 0 : i32
    %c0_i32_2 = arith.constant 0 : i32
    return %c0_i32, %c0_i32_0, %c0_i32_1 : i32, i32, i32
  }
  func.func @transform_6(%arg0: i32) -> (i32, i32, i32) {
    %c0_i32 = arith.constant 0 : i32
    %c0_i32_0 = arith.constant 0 : i32
    %c0_i32_1 = arith.constant 0 : i32
    %c0_i32_2 = arith.constant 0 : i32
    return %c0_i32, %c0_i32_0, %c0_i32_1 : i32, i32, i32
  }
  func.func @transform_7(%arg0: i32) -> (i32, i32) {
    %c0_i32 = arith.constant 0 : i32
    %c0_i32_0 = arith.constant 0 : i32
    %c0_i32_1 = arith.constant 0 : i32
    return %c0_i32, %c0_i32_0 : i32, i32
  }
  func.func @transform_8(%arg0: i32) -> (i32, i32) {
    %c0_i32 = arith.constant 0 : i32
    %c0_i32_0 = arith.constant 0 : i32
    %c0_i32_1 = arith.constant 0 : i32
    return %c0_i32, %c0_i32_0 : i32, i32
  }
  func.func @transform_9(%arg0: i32) -> (i32, i32) {
    %c0_i32 = arith.constant 0 : i32
    %c0_i32_0 = arith.constant 0 : i32
    %c0_i32_1 = arith.constant 0 : i32
    return %c0_i32, %c0_i32_0 : i32, i32
  }
  func.func @transform_10(%arg0: i32) -> (i32, i32, i32) {
    %c0_i32 = arith.constant 0 : i32
    %c0_i32_0 = arith.constant 0 : i32
    %c0_i32_1 = arith.constant 0 : i32
    return %arg0, %c0_i32, %c0_i32_0 : i32, i32, i32
  }
}

</mosaic_0001>

<llo_original>
// kernel: bert_classifier_forward.1
$region0: #{bert_classifier_forward.1}
  #allocation0 [shape = 'u32[]', space=smem, size = 0x4, offset = 0x4, fixed_abs, tag = 'smem constant byte address 0x4 - core index']
  #allocation1 [shape = 'u32[72,128]{1,0:T(1,128)}', space=vmem, size = 0x9000, scoped, tag = 'internal scratch']
  %s0 = inlined_call_operand.vmem [shape: f32[2,8,32], index: 0, kind: input, shape index: {}]
  %s1 = inlined_call_operand.vmem [shape: f32[2,1,8], index: 1, kind: input, shape index: {}]
  %s2 = inlined_call_operand.vmem [shape: bf16[2,32,96], index: 2, kind: input, shape index: {}]
  %s3 = inlined_call_operand.vmem [shape: bf16[2,32,32], index: 3, kind: input, shape index: {}]
  %s4 = inlined_call_operand.vmem [shape: bf16[2,32,64], index: 4, kind: input, shape index: {}]
  %s5 = inlined_call_operand.vmem [shape: bf16[2,64,32], index: 5, kind: input, shape index: {}]
  %s6 = inlined_call_operand.vmem [shape: f32[2,8,96], index: 6, kind: input, shape index: {}]
  %s7 = inlined_call_operand.vmem [shape: f32[8,128], index: 7, kind: input, shape index: {}]
  %s8 = inlined_call_operand.vmem [shape: bf16[32,32], index: 8, kind: input, shape index: {}]
  %s9 = inlined_call_operand.vmem [shape: bf16[32,128], index: 9, kind: input, shape index: {}]
  %s10 = inlined_call_operand.vmem [shape: f32[2,8,128], index: 10, kind: output, shape index: {}]
  %s11 = sld [smem:[#allocation0]]
  $region73: #{bert_classifier_forward.1} parent=0
    _
  %s13 = ssub.s32 1, %s11
  %s14 = scalar_select 0, %s13, %s11
  loop: start=0, step=1, limit=4
  $region2: #{bert_classifier_forward.1} parent=0 // loop_pre_header
    _
  $region3: #{bert_classifier_forward.1} parent=0 // loop_header
    %s16 = sphi 0, %s20
    %p17 = scmp.ge.s32.totalorder %s16, 4
    %s26 = sphi 0, %s28
    %s29 = sphi 0, %s26
    %s30 = sphi 0, %s29
    %s46 = sphi 0, %s30
    %s52 = sphi 0, %s54
    %s55 = sphi 0, %s52
    %s56 = sphi 0, %s55
    %s72 = sphi 0, %s56
    %s76 = sphi 0, %s76
    %s78 = sphi 0, %s76
    %s79 = sphi 0, %s78
    %s93 = sphi 0, %s79
    %s97 = sphi 0, %s97
    %s99 = sphi 0, %s97
    %s100 = sphi 0, %s99
    %s114 = sphi 0, %s100
    %s118 = sphi 0, %s118
    %s120 = sphi 0, %s118
    %s121 = sphi 0, %s120
    %s135 = sphi 0, %s121
    %s139 = sphi 0, %s139
    %s141 = sphi 0, %s139
    %s142 = sphi 0, %s141
    %s156 = sphi 0, %s142
    %s160 = sphi 0, %s160
    %s162 = sphi 0, %s160
    %s163 = sphi 0, %s162
    %s177 = sphi 0, %s163
    %s181 = sphi 0, %s181
    %s183 = sphi 0, %s181
    %s184 = sphi 0, %s183
    %s198 = sphi 0, %s184
    %s202 = sphi 0, %s202
    %s204 = sphi 0, %s202
    %s205 = sphi 0, %s204
    %s219 = sphi 0, %s205
    %s223 = sphi 0, %s223
    %s225 = sphi 0, %s223
    %s226 = sphi 0, %s225
    %s240 = sphi 0, %s226
    %s246 = sphi 0, %s248
    %s249 = sphi 0, %s246
    %s250 = sphi 0, %s249
    %s266 = sphi 0, %s250
  $region4: #{bert_classifier_forward.1} parent=0 // loop_header_branch
    %19 = sbr.rel (%p17) target = $region8
  $region5: #{bert_classifier_forward.1} parent=0 // loop_body
    %s21 = ssub.s32 %s16, 1
    %s22 = ssub.s32 %s16, 2
    %s23 = sadd.s32 %s16, 1
    %s24 = ssub.s32 %s16, %s23
    %p25 = scmp.eq.s32.totalorder %s24, 0
    %s27 = sadd.s32 %s26, 1
    %s28 = scalar_select %p25, %s26, %s27
    %p31 = pneg %p25
    %p32 = scmp.eq.s32.totalorder %s16, 1
    %p33 = por %p31, %p32
    %p34 = scmp.ne.s32.totalorder %s26, %s29
    %p35 = scmp.eq.s32.totalorder %s16, 0
    %p36 = por %p34, %p35
    %p37 = scmp.ne.s32.totalorder %s26, %s29
    %p38 = scmp.eq.s32.totalorder %s21, 1
    %p39 = por %p37, %p38
    %p40 = scmp.ne.s32.totalorder %s29, %s30
    %p41 = scmp.eq.s32.totalorder %s21, 0
    %p42 = por %p40, %p41
    %p43 = scmp.ne.s32.totalorder %s29, %s30
    %p44 = scmp.eq.s32.totalorder %s22, 1
    %p45 = por %p43, %p44
    %p47 = scmp.ne.s32.totalorder %s30, %s46
    %p48 = scmp.eq.s32.totalorder %s22, 0
    %p49 = por %p47, %p48
    %s50 = ssub.s32 %s16, %s23
    %p51 = scmp.eq.s32.totalorder %s50, 0
    %s53 = sadd.s32 %s52, 1
    %s54 = scalar_select %p51, %s52, %s53
    %p57 = pneg %p51
    %p58 = scmp.eq.s32.totalorder %s16, 1
    %p59 = por %p57, %p58
    %p60 = scmp.ne.s32.totalorder %s52, %s55
    %p61 = scmp.eq.s32.totalorder %s16, 0
    %p62 = por %p60, %p61
    %p63 = scmp.ne.s32.totalorder %s52, %s55
    %p64 = scmp.eq.s32.totalorder %s21, 1
    %p65 = por %p63, %p64
    %p66 = scmp.ne.s32.totalorder %s55, %s56
    %p67 = scmp.eq.s32.totalorder %s21, 0
    %p68 = por %p66, %p67
    %p69 = scmp.ne.s32.totalorder %s55, %s56
    %p70 = scmp.eq.s32.totalorder %s22, 1
    %p71 = por %p69, %p70
    %p73 = scmp.ne.s32.totalorder %s56, %s72
    %p74 = scmp.eq.s32.totalorder %s22, 0
    %p75 = por %p73, %p74
    %s77 = sadd.s32 %s76, 1
    %p80 = scmp.eq.s32.totalorder %s16, 1
    %p81 = scmp.ne.s32.totalorder %s76, %s78
    %p82 = scmp.eq.s32.totalorder %s16, 0
    %p83 = por %p81, %p82
    %p84 = scmp.ne.s32.totalorder %s76, %s78
    %p85 = scmp.eq.s32.totalorder %s21, 1
    %p86 = por %p84, %p85
    %p87 = scmp.ne.s32.totalorder %s78, %s79
    %p88 = scmp.eq.s32.totalorder %s21, 0
    %p89 = por %p87, %p88
    %p90 = scmp.ne.s32.totalorder %s78, %s79
    %p91 = scmp.eq.s32.totalorder %s22, 1
    %p92 = por %p90, %p91
    %p94 = scmp.ne.s32.totalorder %s79, %s93
    %p95 = scmp.eq.s32.totalorder %s22, 0
    %p96 = por %p94, %p95
    %s98 = sadd.s32 %s97, 1
    %p101 = scmp.eq.s32.totalorder %s16, 1
    %p102 = scmp.ne.s32.totalorder %s97, %s99
    %p103 = scmp.eq.s32.totalorder %s16, 0
    %p104 = por %p102, %p103
    %p105 = scmp.ne.s32.totalorder %s97, %s99
    %p106 = scmp.eq.s32.totalorder %s21, 1
    %p107 = por %p105, %p106
    %p108 = scmp.ne.s32.totalorder %s99, %s100
    %p109 = scmp.eq.s32.totalorder %s21, 0
    %p110 = por %p108, %p109
    %p111 = scmp.ne.s32.totalorder %s99, %s100
    %p112 = scmp.eq.s32.totalorder %s22, 1
    %p113 = por %p111, %p112
    %p115 = scmp.ne.s32.totalorder %s100, %s114
    %p116 = scmp.eq.s32.totalorder %s22, 0
    %p117 = por %p115, %p116
    %s119 = sadd.s32 %s118, 1
    %p122 = scmp.eq.s32.totalorder %s16, 1
    %p123 = scmp.ne.s32.totalorder %s118, %s120
    %p124 = scmp.eq.s32.totalorder %s16, 0
    %p125 = por %p123, %p124
    %p126 = scmp.ne.s32.totalorder %s118, %s120
    %p127 = scmp.eq.s32.totalorder %s21, 1
    %p128 = por %p126, %p127
    %p129 = scmp.ne.s32.totalorder %s120, %s121
    %p130 = scmp.eq.s32.totalorder %s21, 0
    %p131 = por %p129, %p130
    %p132 = scmp.ne.s32.totalorder %s120, %s121
    %p133 = scmp.eq.s32.totalorder %s22, 1
    %p134 = por %p132, %p133
    %p136 = scmp.ne.s32.totalorder %s121, %s135
    %p137 = scmp.eq.s32.totalorder %s22, 0
    %p138 = por %p136, %p137
    %s140 = sadd.s32 %s139, 1
    %p143 = scmp.eq.s32.totalorder %s16, 1
    %p144 = scmp.ne.s32.totalorder %s139, %s141
    %p145 = scmp.eq.s32.totalorder %s16, 0
    %p146 = por %p144, %p145
    %p147 = scmp.ne.s32.totalorder %s139, %s141
    %p148 = scmp.eq.s32.totalorder %s21, 1
    %p149 = por %p147, %p148
    %p150 = scmp.ne.s32.totalorder %s141, %s142
    %p151 = scmp.eq.s32.totalorder %s21, 0
    %p152 = por %p150, %p151
    %p153 = scmp.ne.s32.totalorder %s141, %s142
    %p154 = scmp.eq.s32.totalorder %s22, 1
    %p155 = por %p153, %p154
    %p157 = scmp.ne.s32.totalorder %s142, %s156
    %p158 = scmp.eq.s32.totalorder %s22, 0
    %p159 = por %p157, %p158
    %s161 = sadd.s32 %s160, 1
    %p164 = scmp.eq.s32.totalorder %s16, 1
    %p165 = scmp.ne.s32.totalorder %s160, %s162
    %p166 = scmp.eq.s32.totalorder %s16, 0
    %p167 = por %p165, %p166
    %p168 = scmp.ne.s32.totalorder %s160, %s162
    %p169 = scmp.eq.s32.totalorder %s21, 1
    %p170 = por %p168, %p169
    %p171 = scmp.ne.s32.totalorder %s162, %s163
    %p172 = scmp.eq.s32.totalorder %s21, 0
    %p173 = por %p171, %p172
    %p174 = scmp.ne.s32.totalorder %s162, %s163
    %p175 = scmp.eq.s32.totalorder %s22, 1
    %p176 = por %p174, %p175
    %p178 = scmp.ne.s32.totalorder %s163, %s177
    %p179 = scmp.eq.s32.totalorder %s22, 0
    %p180 = por %p178, %p179
    %s182 = sadd.s32 %s181, 1
    %p185 = scmp.eq.s32.totalorder %s16, 1
    %p186 = scmp.ne.s32.totalorder %s181, %s183
    %p187 = scmp.eq.s32.totalorder %s16, 0
    %p188 = por %p186, %p187
    %p189 = scmp.ne.s32.totalorder %s181, %s183
    %p190 = scmp.eq.s32.totalorder %s21, 1
    %p191 = por %p189, %p190
    %p192 = scmp.ne.s32.totalorder %s183, %s184
    %p193 = scmp.eq.s32.totalorder %s21, 0
    %p194 = por %p192, %p193
    %p195 = scmp.ne.s32.totalorder %s183, %s184
    %p196 = scmp.eq.s32.totalorder %s22, 1
    %p197 = por %p195, %p196
    %p199 = scmp.ne.s32.totalorder %s184, %s198
    %p200 = scmp.eq.s32.totalorder %s22, 0
    %p201 = por %p199, %p200
    %s203 = sadd.s32 %s202, 1
    %p206 = scmp.eq.s32.totalorder %s16, 1
    %p207 = scmp.ne.s32.totalorder %s202, %s204
    %p208 = scmp.eq.s32.totalorder %s16, 0
    %p209 = por %p207, %p208
    %p210 = scmp.ne.s32.totalorder %s202, %s204
    %p211 = scmp.eq.s32.totalorder %s21, 1
    %p212 = por %p210, %p211
    %p213 = scmp.ne.s32.totalorder %s204, %s205
    %p214 = scmp.eq.s32.totalorder %s21, 0
    %p215 = por %p213, %p214
    %p216 = scmp.ne.s32.totalorder %s204, %s205
    %p217 = scmp.eq.s32.totalorder %s22, 1
    %p218 = por %p216, %p217
    %p220 = scmp.ne.s32.totalorder %s205, %s219
    %p221 = scmp.eq.s32.totalorder %s22, 0
    %p222 = por %p220, %p221
    %s224 = sadd.s32 %s223, 1
    %p227 = scmp.eq.s32.totalorder %s16, 1
    %p228 = scmp.ne.s32.totalorder %s223, %s225
    %p229 = scmp.eq.s32.totalorder %s16, 0
    %p230 = por %p228, %p229
    %p231 = scmp.ne.s32.totalorder %s223, %s225
    %p232 = scmp.eq.s32.totalorder %s21, 1
    %p233 = por %p231, %p232
    %p234 = scmp.ne.s32.totalorder %s225, %s226
    %p235 = scmp.eq.s32.totalorder %s21, 0
    %p236 = por %p234, %p235
    %p237 = scmp.ne.s32.totalorder %s225, %s226
    %p238 = scmp.eq.s32.totalorder %s22, 1
    %p239 = por %p237, %p238
    %p241 = scmp.ne.s32.totalorder %s226, %s240
    %p242 = scmp.eq.s32.totalorder %s22, 0
    %p243 = por %p241, %p242
    %s244 = ssub.s32 %s16, %s23
    %p245 = scmp.eq.s32.totalorder %s244, 0
    %s247 = sadd.s32 %s246, 1
    %s248 = scalar_select %p245, %s246, %s247
    %p251 = pneg %p245
    %p252 = scmp.eq.s32.totalorder %s16, 1
    %p253 = por %p251, %p252
    %p254 = scmp.ne.s32.totalorder %s246, %s249
    %p255 = scmp.eq.s32.totalorder %s16, 0
    %p256 = por %p254, %p255
    %p257 = scmp.ne.s32.totalorder %s246, %s249
    %p258 = scmp.eq.s32.totalorder %s21, 1
    %p259 = por %p257, %p258
    %p260 = scmp.ne.s32.totalorder %s249, %s250
    %p261 = scmp.eq.s32.totalorder %s21, 0
    %p262 = por %p260, %p261
    %p263 = scmp.ne.s32.totalorder %s249, %s250
    %p264 = scmp.eq.s32.totalorder %s22, 1
    %p265 = por %p263, %p264
    %p267 = scmp.ne.s32.totalorder %s250, %s266
    %p268 = scmp.eq.s32.totalorder %s22, 0
    %p269 = por %p267, %p268
    %p270 = scmp.le.s32.totalorder 1, %s16
    %p271 = scmp.lt.s32.totalorder %s16, 3
    %p272 = pnand %p270, %p271
    %p273 = pneg %p272
    // Predicated region
    $region9: #{bert_classifier_forward.1} parent=5 // pred_check
      _
    $region10: #{bert_classifier_forward.1} parent=5 // pred_check_branch
      %275 = sbr.rel (%p272) target = $region12
    $region11: #{bert_classifier_forward.1} parent=5 // pred_region
      %s276 = ssub.s32 %s16, 1
      // Predicated region
      $region13: #{bert_classifier_forward.1} parent=11 // pred_check
        %p277 = pneg %p89
      $region14: #{bert_classifier_forward.1} parent=11 // pred_check_branch
        %279 = sbr.rel (%p277) target = $region16
      $region15: #{bert_classifier_forward.1} parent=11 // pred_region
        _
      $region16: #{bert_classifier_forward.1} parent=11 // pred_fallthru
        _
      // Predicated region
      $region17: #{bert_classifier_forward.1} parent=11 // pred_check
        %p280 = pneg %p110
      $region18: #{bert_classifier_forward.1} parent=11 // pred_check_branch
        %282 = sbr.rel (%p280) target = $region20
      $region19: #{bert_classifier_forward.1} parent=11 // pred_region
        _
      $region20: #{bert_classifier_forward.1} parent=11 // pred_fallthru
        _
      // Predicated region
      $region21: #{bert_classifier_forward.1} parent=11 // pred_check
        %p283 = pneg %p131
      $region22: #{bert_classifier_forward.1} parent=11 // pred_check_branch
        %285 = sbr.rel (%p283) target = $region24
      $region23: #{bert_classifier_forward.1} parent=11 // pred_region
        _
      $region24: #{bert_classifier_forward.1} parent=11 // pred_fallthru
        _
      // Predicated region
      $region25: #{bert_classifier_forward.1} parent=11 // pred_check
        %p286 = pneg %p152
      $region26: #{bert_classifier_forward.1} parent=11 // pred_check_branch
        %288 = sbr.rel (%p286) target = $region28
      $region27: #{bert_classifier_forward.1} parent=11 // pred_region
        _
      $region28: #{bert_classifier_forward.1} parent=11 // pred_fallthru
        _
      // Predicated region
      $region29: #{bert_classifier_forward.1} parent=11 // pred_check
        %p289 = pneg %p173
      $region30: #{bert_classifier_forward.1} parent=11 // pred_check_branch
        %291 = sbr.rel (%p289) target = $region32
      $region31: #{bert_classifier_forward.1} parent=11 // pred_region
        _
      $region32: #{bert_classifier_forward.1} parent=11 // pred_fallthru
        _
      // Predicated region
      $region33: #{bert_classifier_forward.1} parent=11 // pred_check
        %p292 = pneg %p194
      $region34: #{bert_classifier_forward.1} parent=11 // pred_check_branch
        %294 = sbr.rel (%p292) target = $region36
      $region35: #{bert_classifier_forward.1} parent=11 // pred_region
        _
      $region36: #{bert_classifier_forward.1} parent=11 // pred_fallthru
        _
      // Predicated region
      $region37: #{bert_classifier_forward.1} parent=11 // pred_check
        %p295 = pneg %p215
      $region38: #{bert_classifier_forward.1} parent=11 // pred_check_branch
        %297 = sbr.rel (%p295) target = $region40
      $region39: #{bert_classifier_forward.1} parent=11 // pred_region
        _
      $region40: #{bert_classifier_forward.1} parent=11 // pred_fallthru
        _
      // Predicated region
      $region41: #{bert_classifier_forward.1} parent=11 // pred_check
        %p298 = pneg %p236
      $region42: #{bert_classifier_forward.1} parent=11 // pred_check_branch
        %300 = sbr.rel (%p298) target = $region44
      $region43: #{bert_classifier_forward.1} parent=11 // pred_region
        _
      $region44: #{bert_classifier_forward.1} parent=11 // pred_fallthru
        _
    $region12: #{bert_classifier_forward.1} parent=5 // pred_fallthru
      _
    %p301 = scmp.lt.s32.totalorder %s16, 2
    // Predicated region
    $region45: #{bert_classifier_forward.1} parent=5 // pred_check
      %p302 = pneg %p301
    $region46: #{bert_classifier_forward.1} parent=5 // pred_check_branch
      %304 = sbr.rel (%p302) target = $region48
    $region47: #{bert_classifier_forward.1} parent=5 // pred_region
      // Predicated region
      $region49: #{bert_classifier_forward.1} parent=47 // pred_check
        %p305 = pneg %p36
      $region50: #{bert_classifier_forward.1} parent=47 // pred_check_branch
        %307 = sbr.rel (%p305) target = $region52
      $region51: #{bert_classifier_forward.1} parent=47 // pred_region
        %p308 = scmp.lt.s32.totalorder %s16, 1
        %s309 = scalar_select %p308, %s16, 1
        %s310 = smul.addr %s309, 8
        %s311 = scalar_lea.vmem %s0, %s310
      $region52: #{bert_classifier_forward.1} parent=47 // pred_fallthru
        _
      // Predicated region
      $region53: #{bert_classifier_forward.1} parent=47 // pred_check
        %p312 = pneg %p62
      $region54: #{bert_classifier_forward.1} parent=47 // pred_check_branch
        %314 = sbr.rel (%p312) target = $region56
      $region55: #{bert_classifier_forward.1} parent=47 // pred_region
        %p315 = scmp.lt.s32.totalorder %s16, 1
        %s316 = scalar_select %p315, %s16, 1
        %s317 = scalar_lea.vmem %s1, %s316
      $region56: #{bert_classifier_forward.1} parent=47 // pred_fallthru
        _
    $region48: #{bert_classifier_forward.1} parent=5 // pred_fallthru
      _
    %p318 = scmp.le.s32.totalorder 1, %s16
    %p319 = scmp.lt.s32.totalorder %s16, 3
    %p320 = pnand %p318, %p319
    %p321 = pneg %p320
    // Predicated region
    $region57: #{bert_classifier_forward.1} parent=5 // pred_check
      _
    $region58: #{bert_classifier_forward.1} parent=5 // pred_check_branch
      %323 = sbr.rel (%p320) target = $region60
    $region59: #{bert_classifier_forward.1} parent=5 // pred_region
      %s324 = ssub.s32 %s16, 1
      %p325 = scmp.lt.s32.totalorder %s21, 1
      %s326 = scalar_select %p325, %s21, 1
      %s327 = smul.addr %s326, 8
      %s328 = scalar_lea.vmem %s0, %s327
      %p329 = pneg %p42
      %p330 = pneg %p39
      %p331 = scmp.lt.s32.totalorder %s21, 1
      %s332 = scalar_select %p331, %s21, 1
      %s333 = scalar_lea.vmem %s1, %s332
      %p334 = pneg %p68
      %p335 = pneg %p65
      %p336 = pneg %p89
      %p337 = pneg %p86
      %p338 = pneg %p110
      %p339 = pneg %p107
      %p340 = pneg %p131
      %p341 = pneg %p128
      %p342 = pneg %p152
      %p343 = pneg %p149
      %p344 = pneg %p173
      %p345 = pneg %p170
      %p346 = pneg %p194
      %p347 = pneg %p191
      %p348 = pneg %p215
      %p349 = pneg %p212
      %p350 = pneg %p236
      %p351 = pneg %p233
      %p352 = pneg %p262
      %p353 = pneg %p259
      %p354 = scmp.lt.s32.totalorder %s21, 1
      %s355 = scalar_select %p354, %s21, 1
      %s356 = smul.addr %s355, 8
      %s357 = scalar_lea.vmem %s10, %s356
      %p358 = scmp.lt.s32.totalorder %s21, 1
      %s359 = scalar_select %p358, %s21, 1
      %s360 = smul.addr %s359, 8
      %s361 = scalar_lea.vmem %s0, %s360
      %p362 = scmp.lt.s32.totalorder %s21, 1
      %s363 = scalar_select %p362, %s21, 1
      %s364 = scalar_lea.vmem %s1, %s363
      %p365 = scmp.lt.s32.totalorder %s21, 1
      %s366 = scalar_select %p365, %s21, 1
      %s367 = smul.addr %s366, 8
      %s368 = scalar_lea.vmem %s10, %s367
      %v370 = vld [vmem:[%s7] sm:$0xff]
      %v371 = vld [vmem:[%s361] sm:$0xff]
      %vm372 = vcmask 261120
      %v373 = vsel %vm372, %v371, 0.0
      %374 = vadd.xlane.f32.xlu0 %v373
      %v375 = vpop.xlane.xlu0 %374
      %v376 = vrcp.pop 32.0
      %v377 = vmul.f32 32.0, %v376
      %v378 = vsub.f32 1.0, %v377
      %v379 = vmul.f32 %v376, %v378
      %v380 = vadd.f32 %v376, %v379
      %vm381 = vweird.f32 %v376
      %v382 = vsel %vm381, %v376, %v380
      %v383 = vmul.f32 %v375, %v382
      %v384 = vsub.f32 %v371, %v383
      %v385 = vmul.f32 %v384, %v384
      %v386 = vsel %vm372, %v385, 0.0
      %387 = vadd.xlane.f32.xlu0 %v386
      %v388 = vpop.xlane.xlu0 %387
      %v389 = vmul.f32 %v388, %v382
      %v390 = vadd.f32 %v389, 1e-12
      %v391 = vrsqrt.pop %v390
      %v392 = vmul.f32 %v391, %v390
      %v393 = vmul.f32 %v392, %v391
      %v394 = vmul.f32 0.5, %v393
      %v395 = vsub.f32 1.5, %v394
      %v396 = vmul.f32 %v391, %v395
      %vm397 = vweird.f32 %v390
      %vm398 = vweird.f32 %v391
      %vm399 = vmor %vm397, %vm398
      %v400 = vsel %vm399, %v391, %v396
      %v401 = vmul.f32 %v384, %v400
      %v402 = vperm.slane %v370, 0
      %v403 = vmul.f32 %v401, %v402
      %v404 = vperm.slane %v370, 1
      %v405 = vadd.f32 %v403, %v404
      %v406 = vld [vmem:[%s364] sm:$0x1]
      %v408 = vperm.slane %v406, 0
      %v410 = vld [vmem:[%s6] sm:$0xff]
      %v411 = vld [vmem:[%s2] sm:$0xf]
      %v412 = vld [vmem:[%s2 + $0x4] sm:$0xf]
      %v413 = vld [vmem:[%s2 + $0x8] sm:$0xf]
      %v414 = vld [vmem:[%s2 + $0xc] sm:$0xf]
      %v415 = vpack.c.bf16 %v405, %v405
      %v416 = vperm.slane %v410, 0
      %v421 = vunpack.c.l.b16 %v411
      %v422 = vunpack.c.l.b16 %v412
      %v423 = vunpack.c.l.b16 %v413
      %v424 = vunpack.c.l.b16 %v414
      %v425 = vpack.c.b16 %v422, %v421
      %v426 = vpack.c.b16 %v424, %v423
      %v430 = vsel %vm372, %v415, 0
      %432 = vmatpush.bf16.msra.mxu0 0
      %433 = vmatpush.bf16.msra.mxu0 0
      %434 = vmatpush.bf16.msra.mxu0 0
      %435 = vmatpush.bf16.msra.mxu0 0
      %436 = vmatpush.bf16.msra.mxu0 0
      %437 = vmatpush.bf16.msra.mxu0 0
      %438 = vmatpush.bf16.msra.mxu0 %v426
      %439 = vmatpush.bf16.msra.mxu0 %v425
      %440 = vmatmul.bf16.gmra.mxu0 %v430
      %v441 = vpop.f32.mrf.mxu0
      %v442 = vadd.f32 %v416, %v441
      %v443 = vpop.f32.mrf.mxu0
      %444 = vdwg.mxu0
      %v445 = vpack.c.bf16 %v442, %v442
      %447 = vrot.lane.b32.xlu0 %v445, 96
      %v448 = vpop.permute.xlu0 %447
      %vm449 = vcmask 64512
      %v451 = vsel %vm449, %v445, 0
      %v454 = vsel %vm449, %v448, 0
      %456 = vmatpush.bf16.xpose.msra.mxu0 0
      %457 = vmatpush.bf16.xpose.msra.mxu0 0
      %458 = vmatpush.bf16.xpose.msra.mxu0 0
      %459 = vmatpush.bf16.xpose.msra.mxu0 0
      %460 = vmatpush.bf16.xpose.msra.mxu0 0
      %461 = vmatpush.bf16.xpose.msra.mxu0 0
      %462 = vmatpush.bf16.xpose.msra.mxu0 0
      %463 = vmatpush.bf16.xpose.msra.mxu0 %v454
      %464 = vmatmul.bf16.gmra.mxu0 %v451
      %v465 = vpop.f32.mrf.mxu0
      %v466 = vadd.f32 %v408, %v465
      %v467 = vpop.f32.mrf.mxu0
      %468 = vdwg.mxu0
      %v469 = vsel %vm449, %v466, -inf
      %470 = vmax.xlane.f32.xlu0 %v469
      %v471 = vpop.xlane.xlu0 %470
      %v472 = vsub.f32 %v466, %v471
      %v473 = vmul.f32 %v472, 1.442695
      %v474 = vpow.pop %v473
      %v475 = vsel %vm449, %v474, 0.0
      %476 = vadd.xlane.f32.xlu0 %v475
      %v477 = vpop.xlane.xlu0 %476
      %v478 = vrcp.pop %v477
      %v479 = vmul.f32 %v474, %v478
      %v480 = vpack.c.bf16 %v479, %v479
      %481 = vrot.lane.b32.xlu0 %v445, 64
      %v482 = vpop.permute.xlu0 %481
      %v484 = vsel %vm449, %v480, 0
      %vm486 = vcmask 1043456
      %v488 = vsel %vm486, %v482, 0
      %490 = vmatpush.bf16.msra.mxu0 0
      %491 = vmatpush.bf16.msra.mxu0 0
      %492 = vmatpush.bf16.msra.mxu0 0
      %493 = vmatpush.bf16.msra.mxu0 0
      %494 = vmatpush.bf16.msra.mxu0 0
      %495 = vmatpush.bf16.msra.mxu0 0
      %496 = vmatpush.bf16.msra.mxu0 0
      %497 = vmatpush.bf16.msra.mxu0 %v488
      %498 = vmatmul.bf16.gmra.mxu0 %v484
      %v499 = vpop.f32.mrf.mxu0
      %v500 = vadd.f32 0.0, %v499
      %v501 = vpop.f32.mrf.mxu0
      %502 = vdwg.mxu0
      %503 = vrot.lane.b32.xlu0 %v445, 120
      %v504 = vpop.permute.xlu0 %503
      %505 = vrot.lane.b32.xlu0 %v445, 88
      %v506 = vpop.permute.xlu0 %505
      %v508 = vsel %vm449, %v504, 0
      %v511 = vsel %vm449, %v506, 0
      %513 = vmatpush.bf16.xpose.msra.mxu0 0
      %514 = vmatpush.bf16.xpose.msra.mxu0 0
      %515 = vmatpush.bf16.xpose.msra.mxu0 0
      %516 = vmatpush.bf16.xpose.msra.mxu0 0
      %517 = vmatpush.bf16.xpose.msra.mxu0 0
      %518 = vmatpush.bf16.xpose.msra.mxu0 0
      %519 = vmatpush.bf16.xpose.msra.mxu0 0
      %520 = vmatpush.bf16.xpose.msra.mxu0 %v511
      %521 = vmatmul.bf16.gmra.mxu0 %v508
      %v522 = vpop.f32.mrf.mxu0
      %v523 = vadd.f32 %v408, %v522
      %v524 = vpop.f32.mrf.mxu0
      %525 = vdwg.mxu0
      %v526 = vsel %vm449, %v523, -inf
      %527 = vmax.xlane.f32.xlu0 %v526
      %v528 = vpop.xlane.xlu0 %527
      %v529 = vsub.f32 %v523, %v528
      %v530 = vmul.f32 %v529, 1.442695
      %v531 = vpow.pop %v530
      %v532 = vsel %vm449, %v531, 0.0
      %533 = vadd.xlane.f32.xlu0 %v532
      %v534 = vpop.xlane.xlu0 %533
      %v535 = vrcp.pop %v534
      %v536 = vmul.f32 %v531, %v535
      %v537 = vpack.c.bf16 %v536, %v536
      %538 = vrot.lane.b32.xlu0 %v445, 56
      %v539 = vpop.permute.xlu0 %538
      %v541 = vsel %vm449, %v537, 0
      %v544 = vsel %vm486, %v539, 0
      %546 = vmatpush.bf16.msra.mxu0 0
      %547 = vmatpush.bf16.msra.mxu0 0
      %548 = vmatpush.bf16.msra.mxu0 0
      %549 = vmatpush.bf16.msra.mxu0 0
      %550 = vmatpush.bf16.msra.mxu0 0
      %551 = vmatpush.bf16.msra.mxu0 0
      %552 = vmatpush.bf16.msra.mxu0 0
      %553 = vmatpush.bf16.msra.mxu0 %v544
      %554 = vmatmul.bf16.gmra.mxu0 %v541
      %v555 = vpop.f32.mrf.mxu0
      %v556 = vadd.f32 0.0, %v555
      %v557 = vpop.f32.mrf.mxu0
      %558 = vdwg.mxu0
      %559 = vrot.lane.b32.xlu0 %v445, 112
      %v560 = vpop.permute.xlu0 %559
      %561 = vrot.lane.b32.xlu0 %v445, 80
      %v562 = vpop.permute.xlu0 %561
      %v564 = vsel %vm449, %v560, 0
      %v567 = vsel %vm449, %v562, 0
      %569 = vmatpush.bf16.xpose.msra.mxu0 0
      %570 = vmatpush.bf16.xpose.msra.mxu0 0
      %571 = vmatpush.bf16.xpose.msra.mxu0 0
      %572 = vmatpush.bf16.xpose.msra.mxu0 0
      %573 = vmatpush.bf16.xpose.msra.mxu0 0
      %574 = vmatpush.bf16.xpose.msra.mxu0 0
      %575 = vmatpush.bf16.xpose.msra.mxu0 0
      %576 = vmatpush.bf16.xpose.msra.mxu0 %v567
      %577 = vmatmul.bf16.gmra.mxu0 %v564
      %v578 = vpop.f32.mrf.mxu0
      %v579 = vadd.f32 %v408, %v578
      %v580 = vpop.f32.mrf.mxu0
      %581 = vdwg.mxu0
      %v582 = vsel %vm449, %v579, -inf
      %583 = vmax.xlane.f32.xlu0 %v582
      %v584 = vpop.xlane.xlu0 %583
      %v585 = vsub.f32 %v579, %v584
      %v586 = vmul.f32 %v585, 1.442695
      %v587 = vpow.pop %v586
      %v588 = vsel %vm449, %v587, 0.0
      %589 = vadd.xlane.f32.xlu0 %v588
      %v590 = vpop.xlane.xlu0 %589
      %v591 = vrcp.pop %v590
      %v592 = vmul.f32 %v587, %v591
      %v593 = vpack.c.bf16 %v592, %v592
      %594 = vrot.lane.b32.xlu0 %v445, 48
      %v595 = vpop.permute.xlu0 %594
      %v597 = vsel %vm449, %v593, 0
      %v600 = vsel %vm486, %v595, 0
      %602 = vmatpush.bf16.msra.mxu0 0
      %603 = vmatpush.bf16.msra.mxu0 0
      %604 = vmatpush.bf16.msra.mxu0 0
      %605 = vmatpush.bf16.msra.mxu0 0
      %606 = vmatpush.bf16.msra.mxu0 0
      %607 = vmatpush.bf16.msra.mxu0 0
      %608 = vmatpush.bf16.msra.mxu0 0
      %609 = vmatpush.bf16.msra.mxu0 %v600
      %610 = vmatmul.bf16.gmra.mxu0 %v597
      %v611 = vpop.f32.mrf.mxu0
      %v612 = vadd.f32 0.0, %v611
      %v613 = vpop.f32.mrf.mxu0
      %614 = vdwg.mxu0
      %615 = vrot.lane.b32.xlu0 %v445, 104
      %v616 = vpop.permute.xlu0 %615
      %617 = vrot.lane.b32.xlu0 %v445, 72
      %v618 = vpop.permute.xlu0 %617
      %v620 = vsel %vm449, %v616, 0
      %v623 = vsel %vm449, %v618, 0
      %625 = vmatpush.bf16.xpose.msra.mxu0 0
      %626 = vmatpush.bf16.xpose.msra.mxu0 0
      %627 = vmatpush.bf16.xpose.msra.mxu0 0
      %628 = vmatpush.bf16.xpose.msra.mxu0 0
      %629 = vmatpush.bf16.xpose.msra.mxu0 0
      %630 = vmatpush.bf16.xpose.msra.mxu0 0
      %631 = vmatpush.bf16.xpose.msra.mxu0 0
      %632 = vmatpush.bf16.xpose.msra.mxu0 %v623
      %633 = vmatmul.bf16.gmra.mxu0 %v620
      %v634 = vpop.f32.mrf.mxu0
      %v635 = vadd.f32 %v408, %v634
      %v636 = vpop.f32.mrf.mxu0
      %637 = vdwg.mxu0
      %v638 = vsel %vm449, %v635, -inf
      %639 = vmax.xlane.f32.xlu0 %v638
      %v640 = vpop.xlane.xlu0 %639
      %v641 = vsub.f32 %v635, %v640
      %v642 = vmul.f32 %v641, 1.442695
      %v643 = vpow.pop %v642
      %v644 = vsel %vm449, %v643, 0.0
      %645 = vadd.xlane.f32.xlu0 %v644
      %v646 = vpop.xlane.xlu0 %645
      %v647 = vrcp.pop %v646
      %v648 = vmul.f32 %v643, %v647
      %v649 = vpack.c.bf16 %v648, %v648
      %650 = vrot.lane.b32.xlu0 %v445, 40
      %v651 = vpop.permute.xlu0 %650
      %v653 = vsel %vm449, %v649, 0
      %v656 = vsel %vm486, %v651, 0
      %658 = vmatpush.bf16.msra.mxu0 0
      %659 = vmatpush.bf16.msra.mxu0 0
      %660 = vmatpush.bf16.msra.mxu0 0
      %661 = vmatpush.bf16.msra.mxu0 0
      %662 = vmatpush.bf16.msra.mxu0 0
      %663 = vmatpush.bf16.msra.mxu0 0
      %664 = vmatpush.bf16.msra.mxu0 0
      %665 = vmatpush.bf16.msra.mxu0 %v656
      %666 = vmatmul.bf16.gmra.mxu0 %v653
      %v667 = vpop.f32.mrf.mxu0
      %v668 = vadd.f32 0.0, %v667
      %v669 = vpop.f32.mrf.mxu0
      %670 = vdwg.mxu0
      %672 = vrot.lane.b32.xlu0 %v556, 8
      %v673 = vpop.permute.xlu0 %672
      %676 = vrot.lane.b32.xlu0 %v612, 16
      %v677 = vpop.permute.xlu0 %676
      %680 = vrot.lane.b32.xlu0 %v668, 24
      %v681 = vpop.permute.xlu0 %680
      %v683 = vsel %vm449, %v500, %v673
      %vm684 = vcmask 130048
      %v685 = vsel %vm684, %v683, %v677
      %vm686 = vcmask 195584
      %v687 = vsel %vm686, %v685, %v681
      %v688 = vld [vmem:[%s3] sm:$0xf]
      %v689 = vld [vmem:[%s3 + $0x4] sm:$0xf]
      %v690 = vld [vmem:[%s3 + $0x8] sm:$0xf]
      %v691 = vld [vmem:[%s3 + $0xc] sm:$0xf]
      %v692 = vpack.c.bf16 %v687, %v687
      %v693 = vperm.slane %v410, 1
      %v698 = vunpack.c.l.b16 %v688
      %v699 = vunpack.c.l.b16 %v689
      %v700 = vunpack.c.l.b16 %v690
      %v701 = vunpack.c.l.b16 %v691
      %v702 = vpack.c.b16 %v699, %v698
      %v703 = vpack.c.b16 %v701, %v700
      %v707 = vsel %vm372, %v692, 0
      %709 = vmatpush.bf16.msra.mxu0 0
      %710 = vmatpush.bf16.msra.mxu0 0
      %711 = vmatpush.bf16.msra.mxu0 0
      %712 = vmatpush.bf16.msra.mxu0 0
      %713 = vmatpush.bf16.msra.mxu0 0
      %714 = vmatpush.bf16.msra.mxu0 0
      %715 = vmatpush.bf16.msra.mxu0 %v703
      %716 = vmatpush.bf16.msra.mxu0 %v702
      %717 = vmatmul.bf16.gmra.mxu0 %v707
      %v718 = vpop.f32.mrf.mxu0
      %v719 = vadd.f32 %v693, %v718
      %v720 = vpop.f32.mrf.mxu0
      %721 = vdwg.mxu0
      %v722 = vadd.f32 %v719, %v405
      %v723 = vsel %vm372, %v722, 0.0
      %724 = vadd.xlane.f32.xlu0 %v723
      %v725 = vpop.xlane.xlu0 %724
      %v726 = vmul.f32 %v725, %v382
      %v727 = vsub.f32 %v722, %v726
      %v728 = vmul.f32 %v727, %v727
      %v729 = vsel %vm372, %v728, 0.0
      %730 = vadd.xlane.f32.xlu0 %v729
      %v731 = vpop.xlane.xlu0 %730
      %v732 = vmul.f32 %v731, %v382
      %v733 = vadd.f32 %v732, 1e-12
      %v734 = vrsqrt.pop %v733
      %v735 = vmul.f32 %v734, %v733
      %v736 = vmul.f32 %v735, %v734
      %v737 = vmul.f32 0.5, %v736
      %v738 = vsub.f32 1.5, %v737
      %v739 = vmul.f32 %v734, %v738
      %vm740 = vweird.f32 %v733
      %vm741 = vweird.f32 %v734
      %vm742 = vmor %vm740, %vm741
      %v743 = vsel %vm742, %v734, %v739
      %v744 = vmul.f32 %v727, %v743
      %v745 = vperm.slane %v410, 2
      %v746 = vmul.f32 %v744, %v745
      %v747 = vperm.slane %v410, 3
      %v748 = vadd.f32 %v746, %v747
      %v749 = vld [vmem:[%s4] sm:$0xf]
      %v750 = vld [vmem:[%s4 + $0x4] sm:$0xf]
      %v751 = vld [vmem:[%s4 + $0x8] sm:$0xf]
      %v752 = vld [vmem:[%s4 + $0xc] sm:$0xf]
      %v753 = vpack.c.bf16 %v748, %v748
      %v754 = vperm.slane %v410, 4
      %v759 = vunpack.c.l.b16 %v749
      %v760 = vunpack.c.l.b16 %v750
      %v761 = vunpack.c.l.b16 %v751
      %v762 = vunpack.c.l.b16 %v752
      %v763 = vpack.c.b16 %v760, %v759
      %v764 = vpack.c.b16 %v762, %v761
      %v768 = vsel %vm372, %v753, 0
      %770 = vmatpush.bf16.msra.mxu0 0
      %771 = vmatpush.bf16.msra.mxu0 0
      %772 = vmatpush.bf16.msra.mxu0 0
      %773 = vmatpush.bf16.msra.mxu0 0
      %774 = vmatpush.bf16.msra.mxu0 0
      %775 = vmatpush.bf16.msra.mxu0 0
      %776 = vmatpush.bf16.msra.mxu0 %v764
      %777 = vmatpush.bf16.msra.mxu0 %v763
      %778 = vmatmul.bf16.gmra.mxu0 %v768
      %v779 = vpop.f32.mrf.mxu0
      %v780 = vadd.f32 %v754, %v779
      %v781 = vpop.f32.mrf.mxu0
      %782 = vdwg.mxu0
      %v783 = vmul.f32 %v780, 0.5
      %v784 = vmul.f32 %v780, 0.044715
      %v785 = vmul.f32 %v784, %v780
      %v786 = vmul.f32 %v785, %v780
      %v787 = vadd.f32 %v780, %v786
      %v788 = vmul.f32 %v787, 0.7978846
      %v789 = vtanh.pop %v788
      %v790 = vadd.f32 %v789, 1.0
      %v791 = vmul.f32 %v783, %v790
      %v792 = vld [vmem:[%s5] sm:$0xf]
      %v793 = vld [vmem:[%s5 + $0x4] sm:$0xf]
      %v794 = vld [vmem:[%s5 + $0x8] sm:$0xf]
      %v795 = vld [vmem:[%s5 + $0xc] sm:$0xf]
      %v796 = vld [vmem:[%s5 + $0x10] sm:$0xf]
      %v797 = vld [vmem:[%s5 + $0x14] sm:$0xf]
      %v798 = vld [vmem:[%s5 + $0x18] sm:$0xf]
      %v799 = vld [vmem:[%s5 + $0x1c] sm:$0xf]
      %v800 = vpack.c.bf16 %v791, %v791
      %v801 = vperm.slane %v410, 5
      %v810 = vunpack.c.l.b16 %v792
      %v811 = vunpack.c.l.b16 %v793
      %v812 = vunpack.c.l.b16 %v794
      %v813 = vunpack.c.l.b16 %v795
      %v814 = vunpack.c.l.b16 %v796
      %v815 = vunpack.c.l.b16 %v797
      %v816 = vunpack.c.l.b16 %v798
      %v817 = vunpack.c.l.b16 %v799
      %v818 = vpack.c.b16 %v811, %v810
      %v819 = vpack.c.b16 %v813, %v812
      %v820 = vpack.c.b16 %v815, %v814
      %v821 = vpack.c.b16 %v817, %v816
      %vm826 = vcmask 523264
      %v828 = vsel %vm826, %v800, 0
      %830 = vmatpush.bf16.msra.mxu0 0
      %831 = vmatpush.bf16.msra.mxu0 0
      %832 = vmatpush.bf16.msra.mxu0 0
      %833 = vmatpush.bf16.msra.mxu0 0
      %834 = vmatpush.bf16.msra.mxu0 %v821
      %835 = vmatpush.bf16.msra.mxu0 %v820
      %836 = vmatpush.bf16.msra.mxu0 %v819
      %837 = vmatpush.bf16.msra.mxu0 %v818
      %838 = vmatmul.bf16.gmra.mxu0 %v828
      %v839 = vpop.f32.mrf.mxu0
      %v840 = vadd.f32 %v801, %v839
      %v841 = vpop.f32.mrf.mxu0
      %842 = vdwg.mxu0
      %v843 = vadd.f32 %v840, %v748
      %v844 = vsel %vm372, %v843, 0.0
      %845 = vadd.xlane.f32.xlu0 %v844
      %v846 = vpop.xlane.xlu0 %845
      %v847 = vmul.f32 %v846, %v382
      %v848 = vsub.f32 %v843, %v847
      %v849 = vmul.f32 %v848, %v848
      %v850 = vsel %vm372, %v849, 0.0
      %851 = vadd.xlane.f32.xlu0 %v850
      %v852 = vpop.xlane.xlu0 %851
      %v853 = vmul.f32 %v852, %v382
      %v854 = vadd.f32 %v853, 1e-12
      %v855 = vrsqrt.pop %v854
      %v856 = vmul.f32 %v855, %v854
      %v857 = vmul.f32 %v856, %v855
      %v858 = vmul.f32 0.5, %v857
      %v859 = vsub.f32 1.5, %v858
      %v860 = vmul.f32 %v855, %v859
      %vm861 = vweird.f32 %v854
      %vm862 = vweird.f32 %v855
      %vm863 = vmor %vm861, %vm862
      %v864 = vsel %vm863, %v855, %v860
      %v865 = vmul.f32 %v848, %v864
      %v866 = vperm.slane %v410, 6
      %v867 = vmul.f32 %v865, %v866
      %v868 = vperm.slane %v410, 7
      %v869 = vadd.f32 %v867, %v868
      %s870 = scalar_lea.vmem %s6, 8
      %v871 = vld [vmem:[%s870] sm:$0xff]
      %s872 = scalar_lea.vmem %s2, 16
      %v873 = vld [vmem:[%s872] sm:$0xf]
      %v874 = vld [vmem:[%s872 + $0x4] sm:$0xf]
      %v875 = vld [vmem:[%s872 + $0x8] sm:$0xf]
      %v876 = vld [vmem:[%s872 + $0xc] sm:$0xf]
      %v877 = vpack.c.bf16 %v869, %v869
      %v878 = vperm.slane %v871, 0
      %v883 = vunpack.c.l.b16 %v873
      %v884 = vunpack.c.l.b16 %v874
      %v885 = vunpack.c.l.b16 %v875
      %v886 = vunpack.c.l.b16 %v876
      %v887 = vpack.c.b16 %v884, %v883
      %v888 = vpack.c.b16 %v886, %v885
      %v892 = vsel %vm372, %v877, 0
      %894 = vmatpush.bf16.msra.mxu0 0
      %895 = vmatpush.bf16.msra.mxu0 0
      %896 = vmatpush.bf16.msra.mxu0 0
      %897 = vmatpush.bf16.msra.mxu0 0
      %898 = vmatpush.bf16.msra.mxu0 0
      %899 = vmatpush.bf16.msra.mxu0 0
      %900 = vmatpush.bf16.msra.mxu0 %v888
      %901 = vmatpush.bf16.msra.mxu0 %v887
      %902 = vmatmul.bf16.gmra.mxu0 %v892
      %v903 = vpop.f32.mrf.mxu0
      %v904 = vadd.f32 %v878, %v903
      %v905 = vpop.f32.mrf.mxu0
      %906 = vdwg.mxu0
      %v907 = vpack.c.bf16 %v904, %v904
      %909 = vrot.lane.b32.xlu0 %v907, 96
      %v910 = vpop.permute.xlu0 %909
      %v912 = vsel %vm449, %v907, 0
      %v915 = vsel %vm449, %v910, 0
      %917 = vmatpush.bf16.xpose.msra.mxu0 0
      %918 = vmatpush.bf16.xpose.msra.mxu0 0
      %919 = vmatpush.bf16.xpose.msra.mxu0 0
      %920 = vmatpush.bf16.xpose.msra.mxu0 0
      %921 = vmatpush.bf16.xpose.msra.mxu0 0
      %922 = vmatpush.bf16.xpose.msra.mxu0 0
      %923 = vmatpush.bf16.xpose.msra.mxu0 0
      %924 = vmatpush.bf16.xpose.msra.mxu0 %v915
      %925 = vmatmul.bf16.gmra.mxu0 %v912
      %v926 = vpop.f32.mrf.mxu0
      %v927 = vadd.f32 %v408, %v926
      %v928 = vpop.f32.mrf.mxu0
      %929 = vdwg.mxu0
      %v930 = vsel %vm449, %v927, -inf
      %931 = vmax.xlane.f32.xlu0 %v930
      %v932 = vpop.xlane.xlu0 %931
      %v933 = vsub.f32 %v927, %v932
      %v934 = vmul.f32 %v933, 1.442695
      %v935 = vpow.pop %v934
      %v936 = vsel %vm449, %v935, 0.0
      %937 = vadd.xlane.f32.xlu0 %v936
      %v938 = vpop.xlane.xlu0 %937
      %v939 = vrcp.pop %v938
      %v940 = vmul.f32 %v935, %v939
      %v941 = vpack.c.bf16 %v940, %v940
      %942 = vrot.lane.b32.xlu0 %v907, 64
      %v943 = vpop.permute.xlu0 %942
      %v945 = vsel %vm449, %v941, 0
      %v948 = vsel %vm486, %v943, 0
      %950 = vmatpush.bf16.msra.mxu0 0
      %951 = vmatpush.bf16.msra.mxu0 0
      %952 = vmatpush.bf16.msra.mxu0 0
      %953 = vmatpush.bf16.msra.mxu0 0
      %954 = vmatpush.bf16.msra.mxu0 0
      %955 = vmatpush.bf16.msra.mxu0 0
      %956 = vmatpush.bf16.msra.mxu0 0
      %957 = vmatpush.bf16.msra.mxu0 %v948
      %958 = vmatmul.bf16.gmra.mxu0 %v945
      %v959 = vpop.f32.mrf.mxu0
      %v960 = vadd.f32 0.0, %v959
      %v961 = vpop.f32.mrf.mxu0
      %962 = vdwg.mxu0
      %963 = vrot.lane.b32.xlu0 %v907, 120
      %v964 = vpop.permute.xlu0 %963
      %965 = vrot.lane.b32.xlu0 %v907, 88
      %v966 = vpop.permute.xlu0 %965
      %v968 = vsel %vm449, %v964, 0
      %v971 = vsel %vm449, %v966, 0
      %973 = vmatpush.bf16.xpose.msra.mxu0 0
      %974 = vmatpush.bf16.xpose.msra.mxu0 0
      %975 = vmatpush.bf16.xpose.msra.mxu0 0
      %976 = vmatpush.bf16.xpose.msra.mxu0 0
      %977 = vmatpush.bf16.xpose.msra.mxu0 0
      %978 = vmatpush.bf16.xpose.msra.mxu0 0
      %979 = vmatpush.bf16.xpose.msra.mxu0 0
      %980 = vmatpush.bf16.xpose.msra.mxu0 %v971
      %981 = vmatmul.bf16.gmra.mxu0 %v968
      %v982 = vpop.f32.mrf.mxu0
      %v983 = vadd.f32 %v408, %v982
      %v984 = vpop.f32.mrf.mxu0
      %985 = vdwg.mxu0
      %v986 = vsel %vm449, %v983, -inf
      %987 = vmax.xlane.f32.xlu0 %v986
      %v988 = vpop.xlane.xlu0 %987
      %v989 = vsub.f32 %v983, %v988
      %v990 = vmul.f32 %v989, 1.442695
      %v991 = vpow.pop %v990
      %v992 = vsel %vm449, %v991, 0.0
      %993 = vadd.xlane.f32.xlu0 %v992
      %v994 = vpop.xlane.xlu0 %993
      %v995 = vrcp.pop %v994
      %v996 = vmul.f32 %v991, %v995
      %v997 = vpack.c.bf16 %v996, %v996
      %998 = vrot.lane.b32.xlu0 %v907, 56
      %v999 = vpop.permute.xlu0 %998
      %v1001 = vsel %vm449, %v997, 0
      %v1004 = vsel %vm486, %v999, 0
      %1006 = vmatpush.bf16.msra.mxu0 0
      %1007 = vmatpush.bf16.msra.mxu0 0
      %1008 = vmatpush.bf16.msra.mxu0 0
      %1009 = vmatpush.bf16.msra.mxu0 0
      %1010 = vmatpush.bf16.msra.mxu0 0
      %1011 = vmatpush.bf16.msra.mxu0 0
      %1012 = vmatpush.bf16.msra.mxu0 0
      %1013 = vmatpush.bf16.msra.mxu0 %v1004
      %1014 = vmatmul.bf16.gmra.mxu0 %v1001
      %v1015 = vpop.f32.mrf.mxu0
      %v1016 = vadd.f32 0.0, %v1015
      %v1017 = vpop.f32.mrf.mxu0
      %1018 = vdwg.mxu0
      %1019 = vrot.lane.b32.xlu0 %v907, 112
      %v1020 = vpop.permute.xlu0 %1019
      %1021 = vrot.lane.b32.xlu0 %v907, 80
      %v1022 = vpop.permute.xlu0 %1021
      %v1024 = vsel %vm449, %v1020, 0
      %v1027 = vsel %vm449, %v1022, 0
      %1029 = vmatpush.bf16.xpose.msra.mxu0 0
      %1030 = vmatpush.bf16.xpose.msra.mxu0 0
      %1031 = vmatpush.bf16.xpose.msra.mxu0 0
      %1032 = vmatpush.bf16.xpose.msra.mxu0 0
      %1033 = vmatpush.bf16.xpose.msra.mxu0 0
      %1034 = vmatpush.bf16.xpose.msra.mxu0 0
      %1035 = vmatpush.bf16.xpose.msra.mxu0 0
      %1036 = vmatpush.bf16.xpose.msra.mxu0 %v1027
      %1037 = vmatmul.bf16.gmra.mxu0 %v1024
      %v1038 = vpop.f32.mrf.mxu0
      %v1039 = vadd.f32 %v408, %v1038
      %v1040 = vpop.f32.mrf.mxu0
      %1041 = vdwg.mxu0
      %v1042 = vsel %vm449, %v1039, -inf
      %1043 = vmax.xlane.f32.xlu0 %v1042
      %v1044 = vpop.xlane.xlu0 %1043
      %v1045 = vsub.f32 %v1039, %v1044
      %v1046 = vmul.f32 %v1045, 1.442695
      %v1047 = vpow.pop %v1046
      %v1048 = vsel %vm449, %v1047, 0.0
      %1049 = vadd.xlane.f32.xlu0 %v1048
      %v1050 = vpop.xlane.xlu0 %1049
      %v1051 = vrcp.pop %v1050
      %v1052 = vmul.f32 %v1047, %v1051
      %v1053 = vpack.c.bf16 %v1052, %v1052
      %1054 = vrot.lane.b32.xlu0 %v907, 48
      %v1055 = vpop.permute.xlu0 %1054
      %v1057 = vsel %vm449, %v1053, 0
      %v1060 = vsel %vm486, %v1055, 0
      %1062 = vmatpush.bf16.msra.mxu0 0
      %1063 = vmatpush.bf16.msra.mxu0 0
      %1064 = vmatpush.bf16.msra.mxu0 0
      %1065 = vmatpush.bf16.msra.mxu0 0
      %1066 = vmatpush.bf16.msra.mxu0 0
      %1067 = vmatpush.bf16.msra.mxu0 0
      %1068 = vmatpush.bf16.msra.mxu0 0
      %1069 = vmatpush.bf16.msra.mxu0 %v1060
      %1070 = vmatmul.bf16.gmra.mxu0 %v1057
      %v1071 = vpop.f32.mrf.mxu0
      %v1072 = vadd.f32 0.0, %v1071
      %v1073 = vpop.f32.mrf.mxu0
      %1074 = vdwg.mxu0
      %1075 = vrot.lane.b32.xlu0 %v907, 104
      %v1076 = vpop.permute.xlu0 %1075
      %1077 = vrot.lane.b32.xlu0 %v907, 72
      %v1078 = vpop.permute.xlu0 %1077
      %v1080 = vsel %vm449, %v1076, 0
      %v1083 = vsel %vm449, %v1078, 0
      %1085 = vmatpush.bf16.xpose.msra.mxu0 0
      %1086 = vmatpush.bf16.xpose.msra.mxu0 0
      %1087 = vmatpush.bf16.xpose.msra.mxu0 0
      %1088 = vmatpush.bf16.xpose.msra.mxu0 0
      %1089 = vmatpush.bf16.xpose.msra.mxu0 0
      %1090 = vmatpush.bf16.xpose.msra.mxu0 0
      %1091 = vmatpush.bf16.xpose.msra.mxu0 0
      %1092 = vmatpush.bf16.xpose.msra.mxu0 %v1083
      %1093 = vmatmul.bf16.gmra.mxu0 %v1080
      %v1094 = vpop.f32.mrf.mxu0
      %v1095 = vadd.f32 %v408, %v1094
      %v1096 = vpop.f32.mrf.mxu0
      %1097 = vdwg.mxu0
      %v1098 = vsel %vm449, %v1095, -inf
      %1099 = vmax.xlane.f32.xlu0 %v1098
      %v1100 = vpop.xlane.xlu0 %1099
      %v1101 = vsub.f32 %v1095, %v1100
      %v1102 = vmul.f32 %v1101, 1.442695
      %v1103 = vpow.pop %v1102
      %v1104 = vsel %vm449, %v1103, 0.0
      %1105 = vadd.xlane.f32.xlu0 %v1104
      %v1106 = vpop.xlane.xlu0 %1105
      %v1107 = vrcp.pop %v1106
      %v1108 = vmul.f32 %v1103, %v1107
      %v1109 = vpack.c.bf16 %v1108, %v1108
      %1110 = vrot.lane.b32.xlu0 %v907, 40
      %v1111 = vpop.permute.xlu0 %1110
      %v1113 = vsel %vm449, %v1109, 0
      %v1116 = vsel %vm486, %v1111, 0
      %1118 = vmatpush.bf16.msra.mxu0 0
      %1119 = vmatpush.bf16.msra.mxu0 0
      %1120 = vmatpush.bf16.msra.mxu0 0
      %1121 = vmatpush.bf16.msra.mxu0 0
      %1122 = vmatpush.bf16.msra.mxu0 0
      %1123 = vmatpush.bf16.msra.mxu0 0
      %1124 = vmatpush.bf16.msra.mxu0 0
      %1125 = vmatpush.bf16.msra.mxu0 %v1116
      %1126 = vmatmul.bf16.gmra.mxu0 %v1113
      %v1127 = vpop.f32.mrf.mxu0
      %v1128 = vadd.f32 0.0, %v1127
      %v1129 = vpop.f32.mrf.mxu0
      %1130 = vdwg.mxu0
      %1132 = vrot.lane.b32.xlu0 %v1016, 8
      %v1133 = vpop.permute.xlu0 %1132
      %1136 = vrot.lane.b32.xlu0 %v1072, 16
      %v1137 = vpop.permute.xlu0 %1136
      %1140 = vrot.lane.b32.xlu0 %v1128, 24
      %v1141 = vpop.permute.xlu0 %1140
      %v1143 = vsel %vm449, %v960, %v1133
      %v1144 = vsel %vm684, %v1143, %v1137
      %v1145 = vsel %vm686, %v1144, %v1141
      %s1146 = scalar_lea.vmem %s3, 16
      %v1147 = vld [vmem:[%s1146] sm:$0xf]
      %v1148 = vld [vmem:[%s1146 + $0x4] sm:$0xf]
      %v1149 = vld [vmem:[%s1146 + $0x8] sm:$0xf]
      %v1150 = vld [vmem:[%s1146 + $0xc] sm:$0xf]
      %v1151 = vpack.c.bf16 %v1145, %v1145
      %v1152 = vperm.slane %v871, 1
      %v1157 = vunpack.c.l.b16 %v1147
      %v1158 = vunpack.c.l.b16 %v1148
      %v1159 = vunpack.c.l.b16 %v1149
      %v1160 = vunpack.c.l.b16 %v1150
      %v1161 = vpack.c.b16 %v1158, %v1157
      %v1162 = vpack.c.b16 %v1160, %v1159
      %v1166 = vsel %vm372, %v1151, 0
      %1168 = vmatpush.bf16.msra.mxu0 0
      %1169 = vmatpush.bf16.msra.mxu0 0
      %1170 = vmatpush.bf16.msra.mxu0 0
      %1171 = vmatpush.bf16.msra.mxu0 0
      %1172 = vmatpush.bf16.msra.mxu0 0
      %1173 = vmatpush.bf16.msra.mxu0 0
      %1174 = vmatpush.bf16.msra.mxu0 %v1162
      %1175 = vmatpush.bf16.msra.mxu0 %v1161
      %1176 = vmatmul.bf16.gmra.mxu0 %v1166
      %v1177 = vpop.f32.mrf.mxu0
      %v1178 = vadd.f32 %v1152, %v1177
      %v1179 = vpop.f32.mrf.mxu0
      %1180 = vdwg.mxu0
      %v1181 = vadd.f32 %v1178, %v869
      %v1182 = vsel %vm372, %v1181, 0.0
      %1183 = vadd.xlane.f32.xlu0 %v1182
      %v1184 = vpop.xlane.xlu0 %1183
      %v1185 = vmul.f32 %v1184, %v382
      %v1186 = vsub.f32 %v1181, %v1185
      %v1187 = vmul.f32 %v1186, %v1186
      %v1188 = vsel %vm372, %v1187, 0.0
      %1189 = vadd.xlane.f32.xlu0 %v1188
      %v1190 = vpop.xlane.xlu0 %1189
      %v1191 = vmul.f32 %v1190, %v382
      %v1192 = vadd.f32 %v1191, 1e-12
      %v1193 = vrsqrt.pop %v1192
      %v1194 = vmul.f32 %v1193, %v1192
      %v1195 = vmul.f32 %v1194, %v1193
      %v1196 = vmul.f32 0.5, %v1195
      %v1197 = vsub.f32 1.5, %v1196
      %v1198 = vmul.f32 %v1193, %v1197
      %vm1199 = vweird.f32 %v1192
      %vm1200 = vweird.f32 %v1193
      %vm1201 = vmor %vm1199, %vm1200
      %v1202 = vsel %vm1201, %v1193, %v1198
      %v1203 = vmul.f32 %v1186, %v1202
      %v1204 = vperm.slane %v871, 2
      %v1205 = vmul.f32 %v1203, %v1204
      %v1206 = vperm.slane %v871, 3
      %v1207 = vadd.f32 %v1205, %v1206
      %s1208 = scalar_lea.vmem %s4, 16
      %v1209 = vld [vmem:[%s1208] sm:$0xf]
      %v1210 = vld [vmem:[%s1208 + $0x4] sm:$0xf]
      %v1211 = vld [vmem:[%s1208 + $0x8] sm:$0xf]
      %v1212 = vld [vmem:[%s1208 + $0xc] sm:$0xf]
      %v1213 = vpack.c.bf16 %v1207, %v1207
      %v1214 = vperm.slane %v871, 4
      %v1219 = vunpack.c.l.b16 %v1209
      %v1220 = vunpack.c.l.b16 %v1210
      %v1221 = vunpack.c.l.b16 %v1211
      %v1222 = vunpack.c.l.b16 %v1212
      %v1223 = vpack.c.b16 %v1220, %v1219
      %v1224 = vpack.c.b16 %v1222, %v1221
      %v1228 = vsel %vm372, %v1213, 0
      %1230 = vmatpush.bf16.msra.mxu0 0
      %1231 = vmatpush.bf16.msra.mxu0 0
      %1232 = vmatpush.bf16.msra.mxu0 0
      %1233 = vmatpush.bf16.msra.mxu0 0
      %1234 = vmatpush.bf16.msra.mxu0 0
      %1235 = vmatpush.bf16.msra.mxu0 0
      %1236 = vmatpush.bf16.msra.mxu0 %v1224
      %1237 = vmatpush.bf16.msra.mxu0 %v1223
      %1238 = vmatmul.bf16.gmra.mxu0 %v1228
      %v1239 = vpop.f32.mrf.mxu0
      %v1240 = vadd.f32 %v1214, %v1239
      %v1241 = vpop.f32.mrf.mxu0
      %1242 = vdwg.mxu0
      %v1243 = vmul.f32 %v1240, 0.5
      %v1244 = vmul.f32 %v1240, 0.044715
      %v1245 = vmul.f32 %v1244, %v1240
      %v1246 = vmul.f32 %v1245, %v1240
      %v1247 = vadd.f32 %v1240, %v1246
      %v1248 = vmul.f32 %v1247, 0.7978846
      %v1249 = vtanh.pop %v1248
      %v1250 = vadd.f32 %v1249, 1.0
      %v1251 = vmul.f32 %v1243, %v1250
      %s1252 = scalar_lea.vmem %s5, 32
      %v1253 = vld [vmem:[%s1252] sm:$0xf]
      %v1254 = vld [vmem:[%s1252 + $0x4] sm:$0xf]
      %v1255 = vld [vmem:[%s1252 + $0x8] sm:$0xf]
      %v1256 = vld [vmem:[%s1252 + $0xc] sm:$0xf]
      %v1257 = vld [vmem:[%s1252 + $0x10] sm:$0xf]
      %v1258 = vld [vmem:[%s1252 + $0x14] sm:$0xf]
      %v1259 = vld [vmem:[%s1252 + $0x18] sm:$0xf]
      %v1260 = vld [vmem:[%s1252 + $0x1c] sm:$0xf]
      %v1261 = vpack.c.bf16 %v1251, %v1251
      %v1262 = vperm.slane %v871, 5
      %v1271 = vunpack.c.l.b16 %v1253
      %v1272 = vunpack.c.l.b16 %v1254
      %v1273 = vunpack.c.l.b16 %v1255
      %v1274 = vunpack.c.l.b16 %v1256
      %v1275 = vunpack.c.l.b16 %v1257
      %v1276 = vunpack.c.l.b16 %v1258
      %v1277 = vunpack.c.l.b16 %v1259
      %v1278 = vunpack.c.l.b16 %v1260
      %v1279 = vpack.c.b16 %v1272, %v1271
      %v1280 = vpack.c.b16 %v1274, %v1273
      %v1281 = vpack.c.b16 %v1276, %v1275
      %v1282 = vpack.c.b16 %v1278, %v1277
      %v1288 = vsel %vm826, %v1261, 0
      %1290 = vmatpush.bf16.msra.mxu0 0
      %1291 = vmatpush.bf16.msra.mxu0 0
      %1292 = vmatpush.bf16.msra.mxu0 0
      %1293 = vmatpush.bf16.msra.mxu0 0
      %1294 = vmatpush.bf16.msra.mxu0 %v1282
      %1295 = vmatpush.bf16.msra.mxu0 %v1281
      %1296 = vmatpush.bf16.msra.mxu0 %v1280
      %1297 = vmatpush.bf16.msra.mxu0 %v1279
      %1298 = vmatmul.bf16.gmra.mxu0 %v1288
      %v1299 = vpop.f32.mrf.mxu0
      %v1300 = vadd.f32 %v1262, %v1299
      %v1301 = vpop.f32.mrf.mxu0
      %1302 = vdwg.mxu0
      %v1303 = vadd.f32 %v1300, %v1207
      %v1304 = vsel %vm372, %v1303, 0.0
      %1305 = vadd.xlane.f32.xlu0 %v1304
      %v1306 = vpop.xlane.xlu0 %1305
      %v1307 = vmul.f32 %v1306, %v382
      %v1308 = vsub.f32 %v1303, %v1307
      %v1309 = vmul.f32 %v1308, %v1308
      %v1310 = vsel %vm372, %v1309, 0.0
      %1311 = vadd.xlane.f32.xlu0 %v1310
      %v1312 = vpop.xlane.xlu0 %1311
      %v1313 = vmul.f32 %v1312, %v382
      %v1314 = vadd.f32 %v1313, 1e-12
      %v1315 = vrsqrt.pop %v1314
      %v1316 = vmul.f32 %v1315, %v1314
      %v1317 = vmul.f32 %v1316, %v1315
      %v1318 = vmul.f32 0.5, %v1317
      %v1319 = vsub.f32 1.5, %v1318
      %v1320 = vmul.f32 %v1315, %v1319
      %vm1321 = vweird.f32 %v1314
      %vm1322 = vweird.f32 %v1315
      %vm1323 = vmor %vm1321, %vm1322
      %v1324 = vsel %vm1323, %v1315, %v1320
      %v1325 = vmul.f32 %v1308, %v1324
      %v1326 = vperm.slane %v871, 6
      %v1327 = vmul.f32 %v1325, %v1326
      %v1328 = vperm.slane %v871, 7
      %v1329 = vadd.f32 %v1327, %v1328
      %v1330 = vld [vmem:[%s8] sm:$0xf]
      %v1331 = vld [vmem:[%s8 + $0x4] sm:$0xf]
      %v1332 = vld [vmem:[%s8 + $0x8] sm:$0xf]
      %v1333 = vld [vmem:[%s8 + $0xc] sm:$0xf]
      %v1334 = vpack.c.bf16 %v1329, %v1329
      %v1335 = vperm.slane %v370, 2
      %v1340 = vunpack.c.l.b16 %v1330
      %v1341 = vunpack.c.l.b16 %v1331
      %v1342 = vunpack.c.l.b16 %v1332
      %v1343 = vunpack.c.l.b16 %v1333
      %v1344 = vpack.c.b16 %v1341, %v1340
      %v1345 = vpack.c.b16 %v1343, %v1342
      %v1349 = vsel %vm372, %v1334, 0
      %1351 = vmatpush.bf16.msra.mxu0 0
      %1352 = vmatpush.bf16.msra.mxu0 0
      %1353 = vmatpush.bf16.msra.mxu0 0
      %1354 = vmatpush.bf16.msra.mxu0 0
      %1355 = vmatpush.bf16.msra.mxu0 0
      %1356 = vmatpush.bf16.msra.mxu0 0
      %1357 = vmatpush.bf16.msra.mxu0 %v1345
      %1358 = vmatpush.bf16.msra.mxu0 %v1344
      %1359 = vmatmul.bf16.gmra.mxu0 %v1349
      %v1360 = vpop.f32.mrf.mxu0
      %v1361 = vadd.f32 %v1335, %v1360
      %v1362 = vpop.f32.mrf.mxu0
      %1363 = vdwg.mxu0
      %v1364 = vtanh.pop %v1361
      %v1365 = vld [vmem:[%s9] sm:$0xf]
      %v1366 = vld [vmem:[%s9 + $0x4] sm:$0xf]
      %v1367 = vld [vmem:[%s9 + $0x8] sm:$0xf]
      %v1368 = vld [vmem:[%s9 + $0xc] sm:$0xf]
      %v1369 = vpack.c.bf16 %v1364, %v1364
      %v1370 = vperm.slane %v370, 3
      %v1375 = vunpack.c.l.b16 %v1365
      %v1376 = vunpack.c.l.b16 %v1366
      %v1377 = vunpack.c.l.b16 %v1367
      %v1378 = vunpack.c.l.b16 %v1368
      %v1379 = vpack.c.b16 %v1376, %v1375
      %v1380 = vpack.c.b16 %v1378, %v1377
      %v1384 = vsel %vm372, %v1369, 0
      %1386 = vmatpush.bf16.msra.mxu0 0
      %1387 = vmatpush.bf16.msra.mxu0 0
      %1388 = vmatpush.bf16.msra.mxu0 0
      %1389 = vmatpush.bf16.msra.mxu0 0
      %1390 = vmatpush.bf16.msra.mxu0 0
      %1391 = vmatpush.bf16.msra.mxu0 0
      %1392 = vmatpush.bf16.msra.mxu0 %v1380
      %1393 = vmatpush.bf16.msra.mxu0 %v1379
      %1394 = vmatmul.bf16.gmra.mxu0 %v1384
      %v1395 = vpop.f32.mrf.mxu0
      %v1396 = vadd.f32 %v1370, %v1395
      %v1397 = vpop.f32.mrf.mxu0
      %1398 = vdwg.mxu0
      %1399 = vst [vmem:[%s368] sm:$0xff] %v1396
      %p1400 = scmp.lt.s32.totalorder %s21, 1
      %s1401 = scalar_select %p1400, %s21, 1
      %s1402 = smul.addr %s1401, 8
      %s1403 = scalar_lea.vmem %s10, %s1402
      // Predicated region
      $region61: #{bert_classifier_forward.1} parent=59 // pred_check
        %p1404 = pneg %p259
      $region62: #{bert_classifier_forward.1} parent=59 // pred_check_branch
        %1406 = sbr.rel (%p1404) target = $region64
      $region63: #{bert_classifier_forward.1} parent=59 // pred_region
        _
      $region64: #{bert_classifier_forward.1} parent=59 // pred_fallthru
        _
    $region60: #{bert_classifier_forward.1} parent=5 // pred_fallthru
      _
    %p1407 = scmp.le.s32.totalorder 2, %s16
    // Predicated region
    $region65: #{bert_classifier_forward.1} parent=5 // pred_check
      %p1408 = pneg %p1407
    $region66: #{bert_classifier_forward.1} parent=5 // pred_check_branch
      %1410 = sbr.rel (%p1408) target = $region68
    $region67: #{bert_classifier_forward.1} parent=5 // pred_region
      %s1411 = ssub.s32 %s16, 2
      // Predicated region
      $region69: #{bert_classifier_forward.1} parent=67 // pred_check
        %p1412 = pneg %p265
      $region70: #{bert_classifier_forward.1} parent=67 // pred_check_branch
        %1414 = sbr.rel (%p1412) target = $region72
      $region71: #{bert_classifier_forward.1} parent=67 // pred_region
        %p1415 = scmp.lt.s32.totalorder %s22, 1
        %s1416 = scalar_select %p1415, %s22, 1
        %s1417 = smul.addr %s1416, 8
        %s1418 = scalar_lea.vmem %s10, %s1417
      $region72: #{bert_classifier_forward.1} parent=67 // pred_fallthru
        _
    $region68: #{bert_classifier_forward.1} parent=5 // pred_fallthru
      _
  $region6: #{bert_classifier_forward.1} parent=0 // loop_footer
    %s20 = sadd.s32 1, %s16
  $region7: #{bert_classifier_forward.1} parent=0 // loop_footer_branch
    %15 = sbr.rel target = $region3
  $region8: #{bert_classifier_forward.1} parent=0 // loop_exit
    _

</llo_original>
